<compile_context>
chip_gen: v7x
topology: tpu7x:2x2x1
jax: 0.10.0
libtpu: 0.0.40
codegen_flags: <defaults>
</compile_context>

<pallas_src>
import functools

import jax
import jax.numpy as jnp
from jax import lax
from jax.experimental import pallas as pl
from jax.experimental.pallas import tpu as pltpu


def receiver_kernel(x_ref, w_in_ref, b_ref, whh_t_ref, wlin_t_ref, blin_ref,
                    out_ref, h_scr, c_scr, *, seq, t_chunk, hid):
    """One (batch-chunk, seq-chunk) grid step of the fused Receiver forward.

    x_ref:      (b_chunk, t_chunk, vocab)   native-layout soft tokens
    w_in_ref:   (vocab, 4*hid)              embd @ W_ih^T, gate order [i,f,o,g]
    b_ref:      (1, 4*hid)                  b_ih + b_hh, same gate order
    whh_t_ref:  (hid, 4*hid)                W_hh^T, same gate order
    wlin_t_ref: (hid, image_dim_p)          W_lin^T, lane-padded
    blin_ref:   (1, image_dim_p)
    out_ref:    (b_chunk, image_dim_p)
    h_scr/c_scr:(b_chunk, hid)              recurrent state, persists across t
    """
    t = pl.program_id(1)

    # Init the recurrent state at the first seq chunk of every batch chunk.
    @pl.when(t == 0)
    def _():
        h_scr[...] = jnp.zeros_like(h_scr)
        c_scr[...] = jnp.zeros_like(c_scr)

    b_chunk = x_ref.shape[0]
    vocab = x_ref.shape[2]

    # Prologue: gate pre-activations for the whole chunk in ONE MXU matmul
    # (embedding already folded into w_in), bias folded in.  t_chunk is a
    # multiple of 8 so both reshapes are layout no-ops.
    x2d = x_ref[...].reshape(b_chunk * t_chunk, vocab)
    xg = (jnp.dot(x2d, w_in_ref[...], preferred_element_type=jnp.float32)
          + b_ref[...])
    xg = xg.reshape(b_chunk, t_chunk, 4 * hid)

    # Hoist the recurrent weight load out of the serial loop.
    whh = whh_t_ref[...]
    h = h_scr[...]
    c = c_scr[...]

    needs_mask = (seq % t_chunk) != 0  # only the ragged last chunk needs it

    # Serial recurrence over the chunk.  Static Python loop => static sublane
    # slices of xg (no dynamic-sublane indexing) and full scheduler visibility;
    # t_chunk is capped small so the unroll is bounded.
    for j in range(t_chunk):
        gates = xg[:, j, :] + jnp.dot(h, whh, preferred_element_type=jnp.float32)
        # Gate layout is [i, f, o, g]: one sigmoid slab + one tanh slab.
        s = jax.nn.sigmoid(gates[:, :3 * hid])
        g = jnp.tanh(gates[:, 3 * hid:])
        i_g = s[:, 0 * hid:1 * hid]
        f_g = s[:, 1 * hid:2 * hid]
        o_g = s[:, 2 * hid:3 * hid]
        c_new = f_g * c + i_g * g
        h_new = o_g * jnp.tanh(c_new)
        if needs_mask:
            valid = (t * t_chunk + j) < seq     # padded timesteps: keep state
            h = jnp.where(valid, h_new, h)
            c = jnp.where(valid, c_new, c)
        else:
            h, c = h_new, c_new

    h_scr[...] = h
    c_scr[...] = c

    # Epilogue: final linear projection on the last hidden state
    # (lane-dense padded output; padding sliced off in the wrapper).
    @pl.when(t == pl.num_programs(1) - 1)
    def _():
        out_ref[...] = (jnp.dot(h, wlin_t_ref[...],
                                preferred_element_type=jnp.float32)
                        + blin_ref[...])


def _round_up(x, m):
    return m * pl.cdiv(x, m)


def fold_params(params, image_dim_p):
    """Fold embd into the LSTM input projection, combine biases, permute the
    packed gate layout from PyTorch's [i,f,g,o] to [i,f,o,g] and lane-pad the
    output projection.  For inference loops, call once and reuse the result."""
    embd, w_ih, w_hh, b_ih, b_hh, w_lin, b_lin = (
        params["embd"], params["w_ih"], params["w_hh"], params["b_ih"],
        params["b_hh"], params["w_lin"], params["b_lin"])
    hid = w_hh.shape[1]
    image_dim = w_lin.shape[0]

    def permute_gates(m):  # columns packed [i,f,g,o] -> [i,f,o,g]
        return jnp.concatenate(
            [m[..., :2 * hid], m[..., 3 * hid:4 * hid], m[..., 2 * hid:3 * hid]],
            axis=-1)

    w_in = permute_gates(jnp.dot(embd, w_ih.T))            # (vocab, 4*hid)
    b = permute_gates((b_ih + b_hh).reshape(1, 4 * hid))   # (1, 4*hid)
    whh_t = permute_gates(w_hh.T)                          # (hid, 4*hid)

    wlin_t = jnp.zeros((hid, image_dim_p), jnp.float32).at[:, :image_dim].set(w_lin.T)
    blin = jnp.zeros((1, image_dim_p), jnp.float32).at[:, :image_dim].set(b_lin)
    return w_in, b, whh_t, wlin_t, blin


def receiver_forward(x, params):
    """x: (batch, seq, vocab) float32. Returns (batch, image_dim) float32."""
    batch, seq, vocab = x.shape
    if seq < 1:
        raise ValueError("Receiver requires seq >= 1")
    hid = params["w_hh"].shape[1]
    image_dim = params["w_lin"].shape[0]
    image_dim_p = _round_up(image_dim, 128)   # lane-dense output stores

    # --- batch tiling: sublane-pad; split into >=2 chunks when batch is large
    # enough so the (batch-independent) recurrences can run on both
    # TensorCores on v7x and the pipeline has more parallel grid slots.
    batch_p8 = _round_up(batch, 8)
    if batch_p8 >= 16:
        b_chunk = min(256, _round_up(pl.cdiv(batch_p8, 2), 8))
    else:
        b_chunk = batch_p8
    n_b = pl.cdiv(batch_p8, b_chunk)
    batch_p = n_b * b_chunk

    # --- seq chunking: a multiple of 8 (so in-kernel reshapes are layout
    # no-ops), capped so the double-buffered x block stays within a few MiB
    # (re-derived from the problem size => also fits v7x's smaller VMEM).
    x_blk_budget = 2 * 1024 * 1024            # bytes per x-block buffer
    t_chunk = 8
    while (t_chunk < 32 and t_chunk * 2 <= _round_up(seq, 8)
           and b_chunk * (t_chunk * 2) * vocab * 4 <= x_blk_budget):
        t_chunk *= 2
    n_t = pl.cdiv(seq, t_chunk)
    seq_p = n_t * t_chunk

    # Pad batch / seq (padded timesteps are masked inside the kernel; padded
    # batch rows are sliced off).  NO transpose: x streams in native layout.
    if (batch_p, seq_p) != (batch, seq):
        x = jnp.pad(x, ((0, batch_p - batch), (0, seq_p - seq), (0, 0)))

    w_in, b, whh_t, wlin_t, blin = fold_params(params, image_dim_p)

    # Explicit VMEM budget (v5e default scoped limit is only 16 MiB; v7x has
    # 64 MiB physical), with headroom, clamped to be safe on every generation.
    est = 4 * (2 * b_chunk * t_chunk * vocab        # x block (double buffered)
               + b_chunk * t_chunk * 4 * hid        # xg slab
               + vocab * 4 * hid + 4 * hid          # w_in + bias (single buffered)
               + hid * 4 * hid                      # whh_t
               + hid * image_dim_p + image_dim_p    # wlin_t + blin
               + 2 * b_chunk * image_dim_p          # out block (double buffered)
               + 2 * b_chunk * hid)                 # h/c scratch
    vmem_limit = int(min(48 * 1024 * 1024, max(32 * 1024 * 1024, 2 * est)))

    def weight_spec(shape):
        # Grid-invariant operands: single-buffered to save VMEM headroom.
        return pl.BlockSpec(shape, lambda bi, ti: (0, 0),
                            pipeline_mode=pl.Buffered(1))

    kernel = functools.partial(receiver_kernel, seq=seq, t_chunk=t_chunk, hid=hid)

    out_p = pl.pallas_call(
        kernel,
        out_shape=jax.ShapeDtypeStruct((batch_p, image_dim_p), jnp.float32),
        grid_spec=pltpu.PrefetchScalarGridSpec(
            num_scalar_prefetch=0,
            grid=(n_b, n_t),
            in_specs=[
                pl.BlockSpec((b_chunk, t_chunk, vocab),
                             lambda bi, ti: (bi, ti, 0)),
                weight_spec((vocab, 4 * hid)),
                weight_spec((1, 4 * hid)),
                weight_spec((hid, 4 * hid)),
                weight_spec((hid, image_dim_p)),
                weight_spec((1, image_dim_p)),
            ],
            out_specs=pl.BlockSpec((b_chunk, image_dim_p),
                                   lambda bi, ti: (bi, 0)),
            scratch_shapes=[
                pltpu.VMEM((b_chunk, hid), jnp.float32),   # h carry
                pltpu.VMEM((b_chunk, hid), jnp.float32),   # c carry
            ],
        ),
        compiler_params=pltpu.CompilerParams(
            dimension_semantics=("parallel", "arbitrary"),
            vmem_limit_bytes=vmem_limit,
        ),
    )(x, w_in, b, whh_t, wlin_t, blin)

    return out_p[:batch, :image_dim]


def init_params(key, vocab_size, embd_dim, hid_dim, image_dim):
    """Deterministic parameter init mirroring Receiver.reset_parameters()."""
    k_embd, k_ih, k_hh, k_lin = jax.random.split(key, 4)

    embd = 0.1 * jax.random.normal(k_embd, (vocab_size, embd_dim), jnp.float32)

    # xavier_uniform_ on weight_ih_l0: shape (4*hid, embd_dim)
    limit = jnp.sqrt(6.0 / (4 * hid_dim + embd_dim))
    w_ih = jax.random.uniform(k_ih, (4 * hid_dim, embd_dim),
                              jnp.float32, -limit, limit)

    # orthogonal_ on weight_hh_l0: shape (4*hid, hid) -> orthonormal columns
    a = jax.random.normal(k_hh, (4 * hid_dim, hid_dim), jnp.float32)
    q, _ = jnp.linalg.qr(a)
    w_hh = q.astype(jnp.float32)

    b_ih = jnp.zeros((4 * hid_dim,), jnp.float32)
    # bias_hh: zeros, forget-gate slice [hid:2*hid] set to 1 (PyTorch i,f,g,o)
    b_hh = jnp.zeros((4 * hid_dim,), jnp.float32).at[hid_dim:2 * hid_dim].set(1.0)

    w_lin = 0.1 * jax.random.normal(k_lin, (image_dim, hid_dim), jnp.float32)
    b_lin = jnp.zeros((image_dim,), jnp.float32)

    return dict(embd=embd, w_ih=w_ih, w_hh=w_hh, b_ih=b_ih, b_hh=b_hh,
                w_lin=w_lin, b_lin=b_lin)


def receiver_reference(x, params):
    """Pure-JAX reference of the PyTorch forward for validation."""
    embd, w_ih, w_hh, b_ih, b_hh, w_lin, b_lin = (
        params["embd"], params["w_ih"], params["w_hh"], params["b_ih"],
        params["b_hh"], params["w_lin"], params["b_lin"])
    hid_dim = w_hh.shape[1]
    e = jnp.einsum("bsv,ve->sbe", x, embd)          # time-major embeddings
    batch = x.shape[0]
    h0 = jnp.zeros((batch, hid_dim), jnp.float32)
    c0 = jnp.zeros((batch, hid_dim), jnp.float32)

    def step(carry, e_t):
        h, c = carry
        gates = e_t @ w_ih.T + h @ w_hh.T + b_ih + b_hh
        i = jax.nn.sigmoid(gates[:, 0 * hid_dim:1 * hid_dim])
        f = jax.nn.sigmoid(gates[:, 1 * hid_dim:2 * hid_dim])
        g = jnp.tanh(gates[:, 2 * hid_dim:3 * hid_dim])
        o = jax.nn.sigmoid(gates[:, 3 * hid_dim:4 * hid_dim])
        c = f * c + i * g
        h = o * jnp.tanh(c)
        return (h, c), None

    (h_last, _), _ = lax.scan(step, (h0, c0), e)
    return h_last @ w_lin.T + b_lin


if __name__ == "__main__":
    vocab_size, embd_dim, hid_dim, image_dim = 16, 32, 32, 16

    key = jax.random.PRNGKey(0)
    k_params, k_x1, k_x2 = jax.random.split(key, 3)
    params = init_params(k_params, vocab_size, embd_dim, hid_dim, image_dim)

    # Case 1: clean shapes (batch=2, seq=8), float32 soft-one-hot messages.
    batch, seq = 2, 8
    logits = jax.random.normal(k_x1, (batch, seq, vocab_size), jnp.float32)
    x = jax.nn.softmax(logits, axis=-1)
    out = jax.block_until_ready(receiver_forward(x, params))
    ref = receiver_reference(x, params)
    assert out.shape == (batch, image_dim)
    assert jnp.allclose(out, ref, atol=1e-5, rtol=1e-5), (
        f"max err {jnp.max(jnp.abs(out - ref))}")

    # Case 2: ragged shapes (batch=3, seq=5) exercising batch/seq padding+mask.
    batch2, seq2 = 3, 5
    logits2 = jax.random.normal(k_x2, (batch2, seq2, vocab_size), jnp.float32)
    x2 = jax.nn.softmax(logits2, axis=-1)
    out2 = jax.block_until_ready(receiver_forward(x2, params))
    ref2 = receiver_reference(x2, params)
    assert out2.shape == (batch2, image_dim)
    assert jnp.allclose(out2, ref2, atol=1e-5, rtol=1e-5), (
        f"max err {jnp.max(jnp.abs(out2 - ref2))}")

    print("KERNEL_OK")
</pallas_src>

<mosaic_0001>
module attributes {stable_mosaic.version = 11 : i64} {
  func.func @receiver_kernel(%arg0: i32, %arg1: i32, %arg2: memref<8x8x16xf32, #tpu.memory_space<vmem>>, %arg3: memref<16x128xf32, #tpu.memory_space<vmem>>, %arg4: memref<1x128xf32, #tpu.memory_space<vmem>>, %arg5: memref<32x128xf32, #tpu.memory_space<vmem>>, %arg6: memref<32x128xf32, #tpu.memory_space<vmem>>, %arg7: memref<1x128xf32, #tpu.memory_space<vmem>>, %arg8: memref<8x128xf32, #tpu.memory_space<vmem>>, %arg9: memref<8x32xf32, #tpu.memory_space<vmem>>, %arg10: memref<8x32xf32, #tpu.memory_space<vmem>>) attributes {dimension_semantics = [#tpu.dimension_semantics<parallel>, #tpu.dimension_semantics<arbitrary>], iteration_bounds = array<i64: 1, 1>, scalar_prefetch = 0 : i64, scratch_operands = 2 : i64, tpu.core_type = #tpu.core_type<tc>, window_params = [{transform_indices = @transform_0, window_bounds = array<i64: 8, 8, 16>}, {pipeline_mode = #tpu.pipeline_mode<synchronous>, transform_indices = @transform_1, window_bounds = array<i64: 16, 128>}, {pipeline_mode = #tpu.pipeline_mode<synchronous>, transform_indices = @transform_2, window_bounds = array<i64: 1, 128>}, {pipeline_mode = #tpu.pipeline_mode<synchronous>, transform_indices = @transform_3, window_bounds = array<i64: 32, 128>}, {pipeline_mode = #tpu.pipeline_mode<synchronous>, transform_indices = @transform_4, window_bounds = array<i64: 32, 128>}, {pipeline_mode = #tpu.pipeline_mode<synchronous>, transform_indices = @transform_5, window_bounds = array<i64: 1, 128>}, {transform_indices = @transform_6, window_bounds = array<i64: 8, 128>}]} {
    %c0_i32 = arith.constant 0 : i32
    %0 = arith.cmpi eq, %arg1, %c0_i32 : i32
    %1 = arith.extui %0 : i1 to i32
    %c0_i32_0 = arith.constant 0 : i32
    %2 = arith.cmpi ne, %1, %c0_i32_0 : i32
    scf.if %2 {
      %cst_35 = arith.constant 0.000000e+00 : f32
      %179 = vector.broadcast %cst_35 : f32 to vector<8x32xf32>
      %c0_36 = arith.constant 0 : index
      %c0_37 = arith.constant 0 : index
      %180 = vector.load %arg9[%c0_36, %c0_37] : memref<8x32xf32, #tpu.memory_space<vmem>>, vector<8x32xf32>
      tpu.vector_store %arg9[%c0_36, %c0_37], %179 {strides = array<i32>} : memref<8x32xf32, #tpu.memory_space<vmem>>, vector<8x32xf32>,
      %cst_38 = arith.constant 0.000000e+00 : f32
      %181 = vector.broadcast %cst_38 : f32 to vector<8x32xf32>
      %c0_39 = arith.constant 0 : index
      %c0_40 = arith.constant 0 : index
      %182 = vector.load %arg10[%c0_39, %c0_40] : memref<8x32xf32, #tpu.memory_space<vmem>>, vector<8x32xf32>
      tpu.vector_store %arg10[%c0_39, %c0_40], %181 {strides = array<i32>} : memref<8x32xf32, #tpu.memory_space<vmem>>, vector<8x32xf32>,
    } else {
    }
    %c0 = arith.constant 0 : index
    %c0_1 = arith.constant 0 : index
    %c0_2 = arith.constant 0 : index
    %3 = vector.load %arg2[%c0, %c0_1, %c0_2] : memref<8x8x16xf32, #tpu.memory_space<vmem>>, vector<8x8x16xf32>
    %4 = vector.shape_cast %3 : vector<8x8x16xf32> to vector<64x16xf32>
    %c0_3 = arith.constant 0 : index
    %c0_4 = arith.constant 0 : index
    %5 = vector.load %arg3[%c0_3, %c0_4] : memref<16x128xf32, #tpu.memory_space<vmem>>, vector<16x128xf32>
    %cst = arith.constant dense<0.000000e+00> : vector<64x128xf32>
    %6 = tpu.matmul %4, %5, %cst {dimension_numbers = #tpu.dot_dimension_numbers<[1], [0], [0], [1], [0, 0, 1, 1], [], []>} : vector<64x16xf32>, vector<16x128xf32>, vector<64x128xf32> -> vector<64x128xf32>
    %c0_5 = arith.constant 0 : index
    %c0_6 = arith.constant 0 : index
    %7 = vector.load %arg4[%c0_5, %c0_6] : memref<1x128xf32, #tpu.memory_space<vmem>>, vector<1x128xf32>
    %8 = vector.broadcast %7 : vector<1x128xf32> to vector<64x128xf32>
    %9 = arith.addf %6, %8 : vector<64x128xf32>
    %10 = vector.shape_cast %9 : vector<64x128xf32> to vector<8x8x128xf32>
    %c0_7 = arith.constant 0 : index
    %c0_8 = arith.constant 0 : index
    %11 = vector.load %arg5[%c0_7, %c0_8] : memref<32x128xf32, #tpu.memory_space<vmem>>, vector<32x128xf32>
    %c0_9 = arith.constant 0 : index
    %c0_10 = arith.constant 0 : index
    %12 = vector.load %arg9[%c0_9, %c0_10] : memref<8x32xf32, #tpu.memory_space<vmem>>, vector<8x32xf32>
    %c0_11 = arith.constant 0 : index
    %c0_12 = arith.constant 0 : index
    %13 = vector.load %arg10[%c0_11, %c0_12] : memref<8x32xf32, #tpu.memory_space<vmem>>, vector<8x32xf32>
    %14 = vector.extract_strided_slice %10 {offsets = [0, 0, 0], sizes = [8, 1, 128], strides = [1, 1, 1]} : vector<8x8x128xf32> to vector<8x1x128xf32>
    %15 = vector.shape_cast %14 : vector<8x1x128xf32> to vector<8x128xf32>
    %cst_13 = arith.constant dense<0.000000e+00> : vector<8x128xf32>
    %16 = tpu.matmul %12, %11, %cst_13 {dimension_numbers = #tpu.dot_dimension_numbers<[1], [0], [0], [1], [0, 0, 1, 1], [], []>} : vector<8x32xf32>, vector<32x128xf32>, vector<8x128xf32> -> vector<8x128xf32>
    %17 = arith.addf %15, %16 : vector<8x128xf32>
    %18 = vector.extract_strided_slice %17 {offsets = [0, 0], sizes = [8, 96], strides = [1, 1]} : vector<8x128xf32> to vector<8x96xf32>
    %19 = arith.negf %18 : vector<8x96xf32>
    %20 = math.exp %19 : vector<8x96xf32>
    %cst_14 = arith.constant 1.000000e+00 : f32
    %21 = vector.broadcast %cst_14 : f32 to vector<8x96xf32>
    %22 = arith.addf %21, %20 : vector<8x96xf32>
    %23 = arith.divf %21, %22 : vector<8x96xf32>
    %24 = vector.extract_strided_slice %17 {offsets = [0, 96], sizes = [8, 32], strides = [1, 1]} : vector<8x128xf32> to vector<8x32xf32>
    %25 = math.tanh %24 : vector<8x32xf32>
    %26 = vector.extract_strided_slice %23 {offsets = [0, 0], sizes = [8, 32], strides = [1, 1]} : vector<8x96xf32> to vector<8x32xf32>
    %27 = vector.extract_strided_slice %23 {offsets = [0, 32], sizes = [8, 32], strides = [1, 1]} : vector<8x96xf32> to vector<8x32xf32>
    %28 = vector.extract_strided_slice %23 {offsets = [0, 64], sizes = [8, 32], strides = [1, 1]} : vector<8x96xf32> to vector<8x32xf32>
    %29 = arith.mulf %27, %13 : vector<8x32xf32>
    %30 = arith.mulf %26, %25 : vector<8x32xf32>
    %31 = arith.addf %29, %30 : vector<8x32xf32>
    %32 = math.tanh %31 : vector<8x32xf32>
    %33 = arith.mulf %28, %32 : vector<8x32xf32>
    %34 = vector.extract_strided_slice %10 {offsets = [0, 1, 0], sizes = [8, 1, 128], strides = [1, 1, 1]} : vector<8x8x128xf32> to vector<8x1x128xf32>
    %35 = vector.shape_cast %34 : vector<8x1x128xf32> to vector<8x128xf32>
    %cst_15 = arith.constant dense<0.000000e+00> : vector<8x128xf32>
    %36 = tpu.matmul %33, %11, %cst_15 {dimension_numbers = #tpu.dot_dimension_numbers<[1], [0], [0], [1], [0, 0, 1, 1], [], []>} : vector<8x32xf32>, vector<32x128xf32>, vector<8x128xf32> -> vector<8x128xf32>
    %37 = arith.addf %35, %36 : vector<8x128xf32>
    %38 = vector.extract_strided_slice %37 {offsets = [0, 0], sizes = [8, 96], strides = [1, 1]} : vector<8x128xf32> to vector<8x96xf32>
    %39 = arith.negf %38 : vector<8x96xf32>
    %40 = math.exp %39 : vector<8x96xf32>
    %cst_16 = arith.constant 1.000000e+00 : f32
    %41 = vector.broadcast %cst_16 : f32 to vector<8x96xf32>
    %42 = arith.addf %41, %40 : vector<8x96xf32>
    %43 = arith.divf %41, %42 : vector<8x96xf32>
    %44 = vector.extract_strided_slice %37 {offsets = [0, 96], sizes = [8, 32], strides = [1, 1]} : vector<8x128xf32> to vector<8x32xf32>
    %45 = math.tanh %44 : vector<8x32xf32>
    %46 = vector.extract_strided_slice %43 {offsets = [0, 0], sizes = [8, 32], strides = [1, 1]} : vector<8x96xf32> to vector<8x32xf32>
    %47 = vector.extract_strided_slice %43 {offsets = [0, 32], sizes = [8, 32], strides = [1, 1]} : vector<8x96xf32> to vector<8x32xf32>
    %48 = vector.extract_strided_slice %43 {offsets = [0, 64], sizes = [8, 32], strides = [1, 1]} : vector<8x96xf32> to vector<8x32xf32>
    %49 = arith.mulf %47, %31 : vector<8x32xf32>
    %50 = arith.mulf %46, %45 : vector<8x32xf32>
    %51 = arith.addf %49, %50 : vector<8x32xf32>
    %52 = math.tanh %51 : vector<8x32xf32>
    %53 = arith.mulf %48, %52 : vector<8x32xf32>
    %54 = vector.extract_strided_slice %10 {offsets = [0, 2, 0], sizes = [8, 1, 128], strides = [1, 1, 1]} : vector<8x8x128xf32> to vector<8x1x128xf32>
    %55 = vector.shape_cast %54 : vector<8x1x128xf32> to vector<8x128xf32>
    %cst_17 = arith.constant dense<0.000000e+00> : vector<8x128xf32>
    %56 = tpu.matmul %53, %11, %cst_17 {dimension_numbers = #tpu.dot_dimension_numbers<[1], [0], [0], [1], [0, 0, 1, 1], [], []>} : vector<8x32xf32>, vector<32x128xf32>, vector<8x128xf32> -> vector<8x128xf32>
    %57 = arith.addf %55, %56 : vector<8x128xf32>
    %58 = vector.extract_strided_slice %57 {offsets = [0, 0], sizes = [8, 96], strides = [1, 1]} : vector<8x128xf32> to vector<8x96xf32>
    %59 = arith.negf %58 : vector<8x96xf32>
    %60 = math.exp %59 : vector<8x96xf32>
    %cst_18 = arith.constant 1.000000e+00 : f32
    %61 = vector.broadcast %cst_18 : f32 to vector<8x96xf32>
    %62 = arith.addf %61, %60 : vector<8x96xf32>
    %63 = arith.divf %61, %62 : vector<8x96xf32>
    %64 = vector.extract_strided_slice %57 {offsets = [0, 96], sizes = [8, 32], strides = [1, 1]} : vector<8x128xf32> to vector<8x32xf32>
    %65 = math.tanh %64 : vector<8x32xf32>
    %66 = vector.extract_strided_slice %63 {offsets = [0, 0], sizes = [8, 32], strides = [1, 1]} : vector<8x96xf32> to vector<8x32xf32>
    %67 = vector.extract_strided_slice %63 {offsets = [0, 32], sizes = [8, 32], strides = [1, 1]} : vector<8x96xf32> to vector<8x32xf32>
    %68 = vector.extract_strided_slice %63 {offsets = [0, 64], sizes = [8, 32], strides = [1, 1]} : vector<8x96xf32> to vector<8x32xf32>
    %69 = arith.mulf %67, %51 : vector<8x32xf32>
    %70 = arith.mulf %66, %65 : vector<8x32xf32>
    %71 = arith.addf %69, %70 : vector<8x32xf32>
    %72 = math.tanh %71 : vector<8x32xf32>
    %73 = arith.mulf %68, %72 : vector<8x32xf32>
    %74 = vector.extract_strided_slice %10 {offsets = [0, 3, 0], sizes = [8, 1, 128], strides = [1, 1, 1]} : vector<8x8x128xf32> to vector<8x1x128xf32>
    %75 = vector.shape_cast %74 : vector<8x1x128xf32> to vector<8x128xf32>
    %cst_19 = arith.constant dense<0.000000e+00> : vector<8x128xf32>
    %76 = tpu.matmul %73, %11, %cst_19 {dimension_numbers = #tpu.dot_dimension_numbers<[1], [0], [0], [1], [0, 0, 1, 1], [], []>} : vector<8x32xf32>, vector<32x128xf32>, vector<8x128xf32> -> vector<8x128xf32>
    %77 = arith.addf %75, %76 : vector<8x128xf32>
    %78 = vector.extract_strided_slice %77 {offsets = [0, 0], sizes = [8, 96], strides = [1, 1]} : vector<8x128xf32> to vector<8x96xf32>
    %79 = arith.negf %78 : vector<8x96xf32>
    %80 = math.exp %79 : vector<8x96xf32>
    %cst_20 = arith.constant 1.000000e+00 : f32
    %81 = vector.broadcast %cst_20 : f32 to vector<8x96xf32>
    %82 = arith.addf %81, %80 : vector<8x96xf32>
    %83 = arith.divf %81, %82 : vector<8x96xf32>
    %84 = vector.extract_strided_slice %77 {offsets = [0, 96], sizes = [8, 32], strides = [1, 1]} : vector<8x128xf32> to vector<8x32xf32>
    %85 = math.tanh %84 : vector<8x32xf32>
    %86 = vector.extract_strided_slice %83 {offsets = [0, 0], sizes = [8, 32], strides = [1, 1]} : vector<8x96xf32> to vector<8x32xf32>
    %87 = vector.extract_strided_slice %83 {offsets = [0, 32], sizes = [8, 32], strides = [1, 1]} : vector<8x96xf32> to vector<8x32xf32>
    %88 = vector.extract_strided_slice %83 {offsets = [0, 64], sizes = [8, 32], strides = [1, 1]} : vector<8x96xf32> to vector<8x32xf32>
    %89 = arith.mulf %87, %71 : vector<8x32xf32>
    %90 = arith.mulf %86, %85 : vector<8x32xf32>
    %91 = arith.addf %89, %90 : vector<8x32xf32>
    %92 = math.tanh %91 : vector<8x32xf32>
    %93 = arith.mulf %88, %92 : vector<8x32xf32>
    %94 = vector.extract_strided_slice %10 {offsets = [0, 4, 0], sizes = [8, 1, 128], strides = [1, 1, 1]} : vector<8x8x128xf32> to vector<8x1x128xf32>
    %95 = vector.shape_cast %94 : vector<8x1x128xf32> to vector<8x128xf32>
    %cst_21 = arith.constant dense<0.000000e+00> : vector<8x128xf32>
    %96 = tpu.matmul %93, %11, %cst_21 {dimension_numbers = #tpu.dot_dimension_numbers<[1], [0], [0], [1], [0, 0, 1, 1], [], []>} : vector<8x32xf32>, vector<32x128xf32>, vector<8x128xf32> -> vector<8x128xf32>
    %97 = arith.addf %95, %96 : vector<8x128xf32>
    %98 = vector.extract_strided_slice %97 {offsets = [0, 0], sizes = [8, 96], strides = [1, 1]} : vector<8x128xf32> to vector<8x96xf32>
    %99 = arith.negf %98 : vector<8x96xf32>
    %100 = math.exp %99 : vector<8x96xf32>
    %cst_22 = arith.constant 1.000000e+00 : f32
    %101 = vector.broadcast %cst_22 : f32 to vector<8x96xf32>
    %102 = arith.addf %101, %100 : vector<8x96xf32>
    %103 = arith.divf %101, %102 : vector<8x96xf32>
    %104 = vector.extract_strided_slice %97 {offsets = [0, 96], sizes = [8, 32], strides = [1, 1]} : vector<8x128xf32> to vector<8x32xf32>
    %105 = math.tanh %104 : vector<8x32xf32>
    %106 = vector.extract_strided_slice %103 {offsets = [0, 0], sizes = [8, 32], strides = [1, 1]} : vector<8x96xf32> to vector<8x32xf32>
    %107 = vector.extract_strided_slice %103 {offsets = [0, 32], sizes = [8, 32], strides = [1, 1]} : vector<8x96xf32> to vector<8x32xf32>
    %108 = vector.extract_strided_slice %103 {offsets = [0, 64], sizes = [8, 32], strides = [1, 1]} : vector<8x96xf32> to vector<8x32xf32>
    %109 = arith.mulf %107, %91 : vector<8x32xf32>
    %110 = arith.mulf %106, %105 : vector<8x32xf32>
    %111 = arith.addf %109, %110 : vector<8x32xf32>
    %112 = math.tanh %111 : vector<8x32xf32>
    %113 = arith.mulf %108, %112 : vector<8x32xf32>
    %114 = vector.extract_strided_slice %10 {offsets = [0, 5, 0], sizes = [8, 1, 128], strides = [1, 1, 1]} : vector<8x8x128xf32> to vector<8x1x128xf32>
    %115 = vector.shape_cast %114 : vector<8x1x128xf32> to vector<8x128xf32>
    %cst_23 = arith.constant dense<0.000000e+00> : vector<8x128xf32>
    %116 = tpu.matmul %113, %11, %cst_23 {dimension_numbers = #tpu.dot_dimension_numbers<[1], [0], [0], [1], [0, 0, 1, 1], [], []>} : vector<8x32xf32>, vector<32x128xf32>, vector<8x128xf32> -> vector<8x128xf32>
    %117 = arith.addf %115, %116 : vector<8x128xf32>
    %118 = vector.extract_strided_slice %117 {offsets = [0, 0], sizes = [8, 96], strides = [1, 1]} : vector<8x128xf32> to vector<8x96xf32>
    %119 = arith.negf %118 : vector<8x96xf32>
    %120 = math.exp %119 : vector<8x96xf32>
    %cst_24 = arith.constant 1.000000e+00 : f32
    %121 = vector.broadcast %cst_24 : f32 to vector<8x96xf32>
    %122 = arith.addf %121, %120 : vector<8x96xf32>
    %123 = arith.divf %121, %122 : vector<8x96xf32>
    %124 = vector.extract_strided_slice %117 {offsets = [0, 96], sizes = [8, 32], strides = [1, 1]} : vector<8x128xf32> to vector<8x32xf32>
    %125 = math.tanh %124 : vector<8x32xf32>
    %126 = vector.extract_strided_slice %123 {offsets = [0, 0], sizes = [8, 32], strides = [1, 1]} : vector<8x96xf32> to vector<8x32xf32>
    %127 = vector.extract_strided_slice %123 {offsets = [0, 32], sizes = [8, 32], strides = [1, 1]} : vector<8x96xf32> to vector<8x32xf32>
    %128 = vector.extract_strided_slice %123 {offsets = [0, 64], sizes = [8, 32], strides = [1, 1]} : vector<8x96xf32> to vector<8x32xf32>
    %129 = arith.mulf %127, %111 : vector<8x32xf32>
    %130 = arith.mulf %126, %125 : vector<8x32xf32>
    %131 = arith.addf %129, %130 : vector<8x32xf32>
    %132 = math.tanh %131 : vector<8x32xf32>
    %133 = arith.mulf %128, %132 : vector<8x32xf32>
    %134 = vector.extract_strided_slice %10 {offsets = [0, 6, 0], sizes = [8, 1, 128], strides = [1, 1, 1]} : vector<8x8x128xf32> to vector<8x1x128xf32>
    %135 = vector.shape_cast %134 : vector<8x1x128xf32> to vector<8x128xf32>
    %cst_25 = arith.constant dense<0.000000e+00> : vector<8x128xf32>
    %136 = tpu.matmul %133, %11, %cst_25 {dimension_numbers = #tpu.dot_dimension_numbers<[1], [0], [0], [1], [0, 0, 1, 1], [], []>} : vector<8x32xf32>, vector<32x128xf32>, vector<8x128xf32> -> vector<8x128xf32>
    %137 = arith.addf %135, %136 : vector<8x128xf32>
    %138 = vector.extract_strided_slice %137 {offsets = [0, 0], sizes = [8, 96], strides = [1, 1]} : vector<8x128xf32> to vector<8x96xf32>
    %139 = arith.negf %138 : vector<8x96xf32>
    %140 = math.exp %139 : vector<8x96xf32>
    %cst_26 = arith.constant 1.000000e+00 : f32
    %141 = vector.broadcast %cst_26 : f32 to vector<8x96xf32>
    %142 = arith.addf %141, %140 : vector<8x96xf32>
    %143 = arith.divf %141, %142 : vector<8x96xf32>
    %144 = vector.extract_strided_slice %137 {offsets = [0, 96], sizes = [8, 32], strides = [1, 1]} : vector<8x128xf32> to vector<8x32xf32>
    %145 = math.tanh %144 : vector<8x32xf32>
    %146 = vector.extract_strided_slice %143 {offsets = [0, 0], sizes = [8, 32], strides = [1, 1]} : vector<8x96xf32> to vector<8x32xf32>
    %147 = vector.extract_strided_slice %143 {offsets = [0, 32], sizes = [8, 32], strides = [1, 1]} : vector<8x96xf32> to vector<8x32xf32>
    %148 = vector.extract_strided_slice %143 {offsets = [0, 64], sizes = [8, 32], strides = [1, 1]} : vector<8x96xf32> to vector<8x32xf32>
    %149 = arith.mulf %147, %131 : vector<8x32xf32>
    %150 = arith.mulf %146, %145 : vector<8x32xf32>
    %151 = arith.addf %149, %150 : vector<8x32xf32>
    %152 = math.tanh %151 : vector<8x32xf32>
    %153 = arith.mulf %148, %152 : vector<8x32xf32>
    %154 = vector.extract_strided_slice %10 {offsets = [0, 7, 0], sizes = [8, 1, 128], strides = [1, 1, 1]} : vector<8x8x128xf32> to vector<8x1x128xf32>
    %155 = vector.shape_cast %154 : vector<8x1x128xf32> to vector<8x128xf32>
    %cst_27 = arith.constant dense<0.000000e+00> : vector<8x128xf32>
    %156 = tpu.matmul %153, %11, %cst_27 {dimension_numbers = #tpu.dot_dimension_numbers<[1], [0], [0], [1], [0, 0, 1, 1], [], []>} : vector<8x32xf32>, vector<32x128xf32>, vector<8x128xf32> -> vector<8x128xf32>
    %157 = arith.addf %155, %156 : vector<8x128xf32>
    %158 = vector.extract_strided_slice %157 {offsets = [0, 0], sizes = [8, 96], strides = [1, 1]} : vector<8x128xf32> to vector<8x96xf32>
    %159 = arith.negf %158 : vector<8x96xf32>
    %160 = math.exp %159 : vector<8x96xf32>
    %cst_28 = arith.constant 1.000000e+00 : f32
    %161 = vector.broadcast %cst_28 : f32 to vector<8x96xf32>
    %162 = arith.addf %161, %160 : vector<8x96xf32>
    %163 = arith.divf %161, %162 : vector<8x96xf32>
    %164 = vector.extract_strided_slice %157 {offsets = [0, 96], sizes = [8, 32], strides = [1, 1]} : vector<8x128xf32> to vector<8x32xf32>
    %165 = math.tanh %164 : vector<8x32xf32>
    %166 = vector.extract_strided_slice %163 {offsets = [0, 0], sizes = [8, 32], strides = [1, 1]} : vector<8x96xf32> to vector<8x32xf32>
    %167 = vector.extract_strided_slice %163 {offsets = [0, 32], sizes = [8, 32], strides = [1, 1]} : vector<8x96xf32> to vector<8x32xf32>
    %168 = vector.extract_strided_slice %163 {offsets = [0, 64], sizes = [8, 32], strides = [1, 1]} : vector<8x96xf32> to vector<8x32xf32>
    %169 = arith.mulf %167, %151 : vector<8x32xf32>
    %170 = arith.mulf %166, %165 : vector<8x32xf32>
    %171 = arith.addf %169, %170 : vector<8x32xf32>
    %172 = math.tanh %171 : vector<8x32xf32>
    %173 = arith.mulf %168, %172 : vector<8x32xf32>
    %c0_29 = arith.constant 0 : index
    %c0_30 = arith.constant 0 : index
    %174 = vector.load %arg9[%c0_29, %c0_30] : memref<8x32xf32, #tpu.memory_space<vmem>>, vector<8x32xf32>
    tpu.vector_store %arg9[%c0_29, %c0_30], %173 {strides = array<i32>} : memref<8x32xf32, #tpu.memory_space<vmem>>, vector<8x32xf32>,
    %c0_31 = arith.constant 0 : index
    %c0_32 = arith.constant 0 : index
    %175 = vector.load %arg10[%c0_31, %c0_32] : memref<8x32xf32, #tpu.memory_space<vmem>>, vector<8x32xf32>
    tpu.vector_store %arg10[%c0_31, %c0_32], %171 {strides = array<i32>} : memref<8x32xf32, #tpu.memory_space<vmem>>, vector<8x32xf32>,
    %c0_i32_33 = arith.constant 0 : i32
    %176 = arith.cmpi eq, %arg1, %c0_i32_33 : i32
    %177 = arith.extui %176 : i1 to i32
    %c0_i32_34 = arith.constant 0 : i32
    %178 = arith.cmpi ne, %177, %c0_i32_34 : i32
    scf.if %178 {
      %c0_35 = arith.constant 0 : index
      %c0_36 = arith.constant 0 : index
      %179 = vector.load %arg6[%c0_35, %c0_36] : memref<32x128xf32, #tpu.memory_space<vmem>>, vector<32x128xf32>
      %cst_37 = arith.constant dense<0.000000e+00> : vector<8x128xf32>
      %180 = tpu.matmul %173, %179, %cst_37 {dimension_numbers = #tpu.dot_dimension_numbers<[1], [0], [0], [1], [0, 0, 1, 1], [], []>} : vector<8x32xf32>, vector<32x128xf32>, vector<8x128xf32> -> vector<8x128xf32>
      %c0_38 = arith.constant 0 : index
      %c0_39 = arith.constant 0 : index
      %181 = vector.load %arg7[%c0_38, %c0_39] : memref<1x128xf32, #tpu.memory_space<vmem>>, vector<1x128xf32>
      %182 = vector.broadcast %181 : vector<1x128xf32> to vector<8x128xf32>
      %183 = arith.addf %180, %182 : vector<8x128xf32>
      %c0_40 = arith.constant 0 : index
      %c0_41 = arith.constant 0 : index
      %184 = vector.load %arg8[%c0_40, %c0_41] : memref<8x128xf32, #tpu.memory_space<vmem>>, vector<8x128xf32>
      tpu.vector_store %arg8[%c0_40, %c0_41], %183 {strides = array<i32>} : memref<8x128xf32, #tpu.memory_space<vmem>>, vector<8x128xf32>,
    } else {
    }
    return
  }
  func.func @transform_0(%arg0: i32, %arg1: i32) -> (i32, i32, i32) {
    %c0_i32 = arith.constant 0 : i32
    %c0_i32_0 = arith.constant 0 : i32
    return %arg0, %arg1, %c0_i32 : i32, i32, i32
  }
  func.func @transform_1(%arg0: i32, %arg1: i32) -> (i32, i32) {
    %c0_i32 = arith.constant 0 : i32
    %c0_i32_0 = arith.constant 0 : i32
    %c0_i32_1 = arith.constant 0 : i32
    return %c0_i32, %c0_i32_0 : i32, i32
  }
  func.func @transform_2(%arg0: i32, %arg1: i32) -> (i32, i32) {
    %c0_i32 = arith.constant 0 : i32
    %c0_i32_0 = arith.constant 0 : i32
    %c0_i32_1 = arith.constant 0 : i32
    return %c0_i32, %c0_i32_0 : i32, i32
  }
  func.func @transform_3(%arg0: i32, %arg1: i32) -> (i32, i32) {
    %c0_i32 = arith.constant 0 : i32
    %c0_i32_0 = arith.constant 0 : i32
    %c0_i32_1 = arith.constant 0 : i32
    return %c0_i32, %c0_i32_0 : i32, i32
  }
  func.func @transform_4(%arg0: i32, %arg1: i32) -> (i32, i32) {
    %c0_i32 = arith.constant 0 : i32
    %c0_i32_0 = arith.constant 0 : i32
    %c0_i32_1 = arith.constant 0 : i32
    return %c0_i32, %c0_i32_0 : i32, i32
  }
  func.func @transform_5(%arg0: i32, %arg1: i32) -> (i32, i32) {
    %c0_i32 = arith.constant 0 : i32
    %c0_i32_0 = arith.constant 0 : i32
    %c0_i32_1 = arith.constant 0 : i32
    return %c0_i32, %c0_i32_0 : i32, i32
  }
  func.func @transform_6(%arg0: i32, %arg1: i32) -> (i32, i32) {
    %c0_i32 = arith.constant 0 : i32
    %c0_i32_0 = arith.constant 0 : i32
    return %arg0, %c0_i32 : i32, i32
  }
}

</mosaic_0001>

<llo_original>
// kernel: tpu_custom_call.1
$region0: #{tpu_custom_call.1}
  #allocation0 [shape = 'u32[]', space=smem, size = 0x4, offset = 0x4, fixed_abs, tag = 'smem constant byte address 0x4 - core index']
  #allocation1 [shape = 'u32[144,128]{1,0:T(1,128)}', space=vmem, size = 0x12000, scoped, tag = 'internal scratch']
  #allocation2 [shape = 'f32[8,32]{1,0:T(8,128)}', space=vmem, size = 0x1000, scoped, tag = 'scratch operand']
  #allocation3 [shape = 'f32[8,32]{1,0:T(8,128)}', space=vmem, size = 0x1000, scoped, tag = 'scratch operand']
  %s0 = inlined_call_operand.hbm [shape: f32[8,8,16], index: 0, kind: input, shape index: {}]
  %s1 = inlined_call_operand.hbm [shape: f32[16,128], index: 1, kind: input, shape index: {}]
  %s2 = inlined_call_operand.vmem [shape: f32[1,128], index: 2, kind: input, shape index: {}]
  %s3 = inlined_call_operand.hbm [shape: f32[32,128], index: 3, kind: input, shape index: {}]
  %s4 = inlined_call_operand.hbm [shape: f32[32,128], index: 4, kind: input, shape index: {}]
  %s5 = inlined_call_operand.vmem [shape: f32[1,128], index: 5, kind: input, shape index: {}]
  %s6 = inlined_call_operand.hbm [shape: f32[8,128], index: 6, kind: output, shape index: {}]
  %s7 = sld [smem:[#allocation0]]
  $region58: #{tpu_custom_call.1} parent=0
    _
  %s9 = ssub.s32 1, %s7
  %s10 = scalar_select 0, %s9, %s7
  $region1: #{tpu_custom_call.1} parent=0
    #allocation4 [shape = 'u8[32768]{0}', space=vmem, size = 0x8000, scoped, tag = 'input window, operand 0, single buffered']
    #allocation5 [shape = 's32[1]{0}', space=sflag, size = 0x4, scoped, tag = 'scoped memory for tpu_custom_call.1']
    #allocation6 [shape = 's32[1]{0}', space=sflag, size = 0x4, scoped, tag = 'scoped memory for tpu_custom_call.1']
    #allocation7 [shape = 'u8[8192]{0}', space=vmem, size = 0x2000, scoped, tag = 'input window, operand 1, single buffered']
    #allocation8 [shape = 's32[1]{0}', space=sflag, size = 0x4, scoped, tag = 'scoped memory for tpu_custom_call.1']
    #allocation9 [shape = 'u8[16384]{0}', space=vmem, size = 0x4000, scoped, tag = 'input window, operand 3, single buffered']
    #allocation10 [shape = 'u8[16384]{0}', space=vmem, size = 0x4000, scoped, tag = 'input window, operand 4, single buffered']
    #allocation11 [shape = 's32[1]{0}', space=sflag, size = 0x4, scoped, tag = 'scoped memory for tpu_custom_call.1']
    #allocation12 [shape = 'u8[4096]{0}', space=vmem, size = 0x1000, scoped, tag = 'output window, operand 0, single buffered']
    %11 = vsyncpa [#allocation5], 0
    %12 = vsyncpa [#allocation8], 0
    %13 = vsyncpa [#allocation11], 0
    %14 = vsyncpa [#allocation6], 0
    // Predicated region
    $region2: #{tpu_custom_call.1} parent=1 // pred_check
      _
    $region3: #{tpu_custom_call.1} parent=1 // pred_check_branch
      %16 = sbr.rel (0) target = $region5
    $region4: #{tpu_custom_call.1} parent=1 // pred_region
      %s18 = ssub.s32 1024, 1024
      %19 = vsyncadd [#allocation5], %s18
      %s20 = sshll.u32 [#allocation4], 4
      %s21 = int_to_ptr.vmem [resolvable:$true] %s20
      %26 = dma.hbm_to_vmem [thread:$0]  %s0, 1024, %s21, [#allocation5], 128, 128, 8
    $region5: #{tpu_custom_call.1} parent=1 // pred_fallthru
      _
    // Predicated region
    $region6: #{tpu_custom_call.1} parent=1 // pred_check
      _
    $region7: #{tpu_custom_call.1} parent=1 // pred_check_branch
      %28 = sbr.rel (0) target = $region9
    $region8: #{tpu_custom_call.1} parent=1 // pred_region
      %s30 = ssub.s32 256, 256
      %31 = vsyncadd [#allocation8], %s30
      %s32 = sshll.u32 [#allocation7], 4
      %s33 = int_to_ptr.vmem [resolvable:$true] %s32
      %38 = dma.hbm_to_vmem [thread:$0]  %s1, 256, %s33, [#allocation8], 128, 128, 8
    $region9: #{tpu_custom_call.1} parent=1 // pred_fallthru
      _
    // Predicated region
    $region10: #{tpu_custom_call.1} parent=1 // pred_check
      _
    $region11: #{tpu_custom_call.1} parent=1 // pred_check_branch
      %40 = sbr.rel (0) target = $region13
    $region12: #{tpu_custom_call.1} parent=1 // pred_region
      _
    $region13: #{tpu_custom_call.1} parent=1 // pred_fallthru
      _
    // Predicated region
    $region14: #{tpu_custom_call.1} parent=1 // pred_check
      _
    $region15: #{tpu_custom_call.1} parent=1 // pred_check_branch
      %42 = sbr.rel (0) target = $region17
    $region16: #{tpu_custom_call.1} parent=1 // pred_region
      %s44 = ssub.s32 512, 512
      %45 = vsyncadd [#allocation8], %s44
      %s46 = sshll.u32 [#allocation9], 4
      %s47 = int_to_ptr.vmem [resolvable:$true] %s46
      %52 = dma.hbm_to_vmem [thread:$0]  %s3, 512, %s47, [#allocation8], 128, 128, 8
    $region17: #{tpu_custom_call.1} parent=1 // pred_fallthru
      _
    // Predicated region
    $region18: #{tpu_custom_call.1} parent=1 // pred_check
      _
    $region19: #{tpu_custom_call.1} parent=1 // pred_check_branch
      %54 = sbr.rel (0) target = $region21
    $region20: #{tpu_custom_call.1} parent=1 // pred_region
      %s56 = ssub.s32 512, 512
      %57 = vsyncadd [#allocation11], %s56
      %s58 = sshll.u32 [#allocation10], 4
      %s59 = int_to_ptr.vmem [resolvable:$true] %s58
      %64 = dma.hbm_to_vmem [thread:$0]  %s4, 512, %s59, [#allocation11], 128, 128, 8
    $region21: #{tpu_custom_call.1} parent=1 // pred_fallthru
      _
    // Predicated region
    $region22: #{tpu_custom_call.1} parent=1 // pred_check
      _
    $region23: #{tpu_custom_call.1} parent=1 // pred_check_branch
      %66 = sbr.rel (0) target = $region25
    $region24: #{tpu_custom_call.1} parent=1 // pred_region
      _
    $region25: #{tpu_custom_call.1} parent=1 // pred_fallthru
      _
    // Predicated region
    $region26: #{tpu_custom_call.1} parent=1 // pred_check
      _
    $region27: #{tpu_custom_call.1} parent=1 // pred_check_branch
      %68 = sbr.rel (0) target = $region29
    $region28: #{tpu_custom_call.1} parent=1 // pred_region
      %69 = dma.done [#allocation5], 1024
    $region29: #{tpu_custom_call.1} parent=1 // pred_fallthru
      _
    // Predicated region
    $region30: #{tpu_custom_call.1} parent=1 // pred_check
      _
    $region31: #{tpu_custom_call.1} parent=1 // pred_check_branch
      %71 = sbr.rel (0) target = $region33
    $region32: #{tpu_custom_call.1} parent=1 // pred_region
      %72 = dma.done [#allocation8], 256
    $region33: #{tpu_custom_call.1} parent=1 // pred_fallthru
      _
    // Predicated region
    $region34: #{tpu_custom_call.1} parent=1 // pred_check
      _
    $region35: #{tpu_custom_call.1} parent=1 // pred_check_branch
      %74 = sbr.rel (0) target = $region37
    $region36: #{tpu_custom_call.1} parent=1 // pred_region
      %75 = dma.done [#allocation8], 512
    $region37: #{tpu_custom_call.1} parent=1 // pred_fallthru
      _
    // Predicated region
    $region38: #{tpu_custom_call.1} parent=1 // pred_check
      _
    $region39: #{tpu_custom_call.1} parent=1 // pred_check_branch
      %77 = sbr.rel (0) target = $region41
    $region40: #{tpu_custom_call.1} parent=1 // pred_region
      %78 = dma.done [#allocation11], 512
    $region41: #{tpu_custom_call.1} parent=1 // pred_fallthru
      _
    %p79 = scmp.eq.s32.totalorder 0, 0
    // Predicated region
    $region42: #{tpu_custom_call.1} parent=1 // pred_check
      %p80 = pneg %p79
    $region43: #{tpu_custom_call.1} parent=1 // pred_check_branch
      %82 = sbr.rel (%p80) target = $region45
    $region44: #{tpu_custom_call.1} parent=1 // pred_region
      %vm83 = vcmask 261120
      %84 = vst.msk [vmem:[#allocation2] sm:$0xff] %vm83, 0.0
      %85 = vst.msk [vmem:[#allocation3] sm:$0xff] %vm83, 0.0
    $region45: #{tpu_custom_call.1} parent=1 // pred_fallthru
      _
    %v86 = vld [vmem:[#allocation4] sm:$0xff]
    %v87 = vld [vmem:[#allocation4 + $0x8] sm:$0xff]
    %v88 = vld [vmem:[#allocation4 + $0x10] sm:$0xff]
    %v89 = vld [vmem:[#allocation4 + $0x18] sm:$0xff]
    %v90 = vld [vmem:[#allocation4 + $0x20] sm:$0xff]
    %v91 = vld [vmem:[#allocation4 + $0x28] sm:$0xff]
    %v92 = vld [vmem:[#allocation4 + $0x30] sm:$0xff]
    %v93 = vld [vmem:[#allocation4 + $0x38] sm:$0xff]
    %v94 = vld [vmem:[#allocation7] sm:$0xff]
    %v95 = vld [vmem:[#allocation7 + $0x8] sm:$0xff]
    %v96 = vld [vmem:[%s2] sm:$0x1]
    %v98 = vlaneseq
    %v99 = vshrl.u32 %v98, 7
    %v100 = vsub.s32 0, %v99
    %v101 = vrot.slane %v96, %v100
    %vm103 = vcmask 130048
    %v105 = vsel %vm103, %v86, 0
    %v108 = vsel %vm103, %v87, 0
    %v111 = vsel %vm103, %v88, 0
    %v114 = vsel %vm103, %v89, 0
    %v117 = vsel %vm103, %v90, 0
    %v120 = vsel %vm103, %v91, 0
    %v123 = vsel %vm103, %v92, 0
    %v126 = vsel %vm103, %v93, 0
    %128 = vmatprep.subr.mxu0 0.0
    %129 = vmatpush1.msra.mxu0 %v94
    %130 = vmatprep.subr.mxu0 0.0
    %131 = vmatpush1.msra.mxu0 %v95
    %132 = vmatprep.subr.mxu0 0.0
    %133 = vmatpush1.msra.mxu0 0.0
    %134 = vmatprep.subr.mxu0 0.0
    %135 = vmatpush1.msra.mxu0 0.0
    %136 = vmatprep.subr.mxu0 0.0
    %137 = vmatpush1.msra.mxu0 0.0
    %138 = vmatprep.subr.mxu0 0.0
    %139 = vmatpush1.msra.mxu0 0.0
    %140 = vmatprep.subr.mxu0 0.0
    %141 = vmatpush1.msra.mxu0 0.0
    %142 = vmatprep.subr.mxu0 0.0
    %143 = vmatpush1.msra.mxu0 0.0
    %144 = vmatprep.subr.mxu0 0.0
    %145 = vmatpush1.msra.mxu0 0.0
    %146 = vmatprep.subr.mxu0 0.0
    %147 = vmatpush1.msra.mxu0 0.0
    %148 = vmatprep.subr.mxu0 0.0
    %149 = vmatpush1.msra.mxu0 0.0
    %150 = vmatprep.subr.mxu0 0.0
    %151 = vmatpush1.msra.mxu0 0.0
    %152 = vmatprep.subr.mxu0 0.0
    %153 = vmatpush1.msra.mxu0 0.0
    %154 = vmatprep.subr.mxu0 0.0
    %155 = vmatpush1.msra.mxu0 0.0
    %156 = vmatprep.subr.mxu0 0.0
    %157 = vmatpush1.msra.mxu0 0.0
    %158 = vmatprep.subr.mxu0 0.0
    %159 = vmatpush1.msra.mxu0 0.0
    %160 = vmatprep.subr.mxu0 0.0
    %161 = vmatpush1.msra.mxu0 0.0
    %162 = vmatprep.subr.mxu0 0.0
    %163 = vmatpush1.msra.mxu0 0.0
    %164 = vmatprep.subr.mxu0 0.0
    %165 = vmatpush1.msra.mxu0 0.0
    %166 = vmatprep.subr.mxu0 0.0
    %167 = vmatpush1.msra.mxu0 0.0
    %168 = vmatprep.subr.mxu0 0.0
    %169 = vmatpush1.msra.mxu0 0.0
    %170 = vmatprep.subr.mxu0 0.0
    %171 = vmatpush1.msra.mxu0 0.0
    %172 = vmatprep.subr.mxu0 0.0
    %173 = vmatpush1.msra.mxu0 0.0
    %174 = vmatprep.subr.mxu0 0.0
    %175 = vmatpush1.msra.mxu0 0.0
    %176 = vmatprep.subr.mxu0 0.0
    %177 = vmatpush1.msra.mxu0 0.0
    %178 = vmatprep.subr.mxu0 0.0
    %179 = vmatpush1.msra.mxu0 0.0
    %180 = vmatprep.subr.mxu0 0.0
    %181 = vmatpush1.msra.mxu0 0.0
    %182 = vmatprep.subr.mxu0 0.0
    %183 = vmatpush1.msra.mxu0 0.0
    %184 = vmatprep.subr.mxu0 0.0
    %185 = vmatpush1.msra.mxu0 0.0
    %186 = vmatprep.subr.mxu0 0.0
    %187 = vmatpush1.msra.mxu0 0.0
    %188 = vmatprep.subr.mxu0 0.0
    %189 = vmatpush1.msra.mxu0 0.0
    %190 = vmatprep.subr.mxu0 0.0
    %191 = vmatpush1.msra.mxu0 0.0
    %192 = vmatprep.mubr.f32.mxu0 0.0
    %193 = vmatmul.mubr.f32.gmra.mrb[0].mxu0 %v105
    %v194 = vpop.f32.mrb[0].mxu0
    %v195 = vadd.f32 %v101, %v194
    %v196 = vpop.f32.mrb[0].mxu0
    %197 = vmatprep.mubr.f32.mxu0 0.0
    %198 = vmatmul.mubr.f32.gmra.mrb[0].mxu0 %v108
    %v199 = vpop.f32.mrb[0].mxu0
    %v200 = vadd.f32 %v101, %v199
    %v201 = vpop.f32.mrb[0].mxu0
    %202 = vmatprep.mubr.f32.mxu0 0.0
    %203 = vmatmul.mubr.f32.gmra.mrb[0].mxu0 %v111
    %v204 = vpop.f32.mrb[0].mxu0
    %v205 = vadd.f32 %v101, %v204
    %v206 = vpop.f32.mrb[0].mxu0
    %207 = vmatprep.mubr.f32.mxu0 0.0
    %208 = vmatmul.mubr.f32.gmra.mrb[0].mxu0 %v114
    %v209 = vpop.f32.mrb[0].mxu0
    %v210 = vadd.f32 %v101, %v209
    %v211 = vpop.f32.mrb[0].mxu0
    %212 = vmatprep.mubr.f32.mxu0 0.0
    %213 = vmatmul.mubr.f32.gmra.mrb[0].mxu0 %v117
    %v214 = vpop.f32.mrb[0].mxu0
    %v215 = vadd.f32 %v101, %v214
    %v216 = vpop.f32.mrb[0].mxu0
    %217 = vmatprep.mubr.f32.mxu0 0.0
    %218 = vmatmul.mubr.f32.gmra.mrb[0].mxu0 %v120
    %v219 = vpop.f32.mrb[0].mxu0
    %v220 = vadd.f32 %v101, %v219
    %v221 = vpop.f32.mrb[0].mxu0
    %222 = vmatprep.mubr.f32.mxu0 0.0
    %223 = vmatmul.mubr.f32.gmra.mrb[0].mxu0 %v123
    %v224 = vpop.f32.mrb[0].mxu0
    %v225 = vadd.f32 %v101, %v224
    %v226 = vpop.f32.mrb[0].mxu0
    %227 = vmatprep.mubr.f32.mxu0 0.0
    %228 = vmatmul.mubr.f32.gmra.mrb[0].mxu0 %v126
    %v229 = vpop.f32.mrb[0].mxu0
    %v230 = vadd.f32 %v101, %v229
    %v231 = vpop.f32.mrb[0].mxu0
    %232 = vdwg.mxu0
    %v233 = vld [vmem:[#allocation9] sm:$0xff]
    %v234 = vld [vmem:[#allocation9 + $0x8] sm:$0xff]
    %v235 = vld [vmem:[#allocation9 + $0x10] sm:$0xff]
    %v236 = vld [vmem:[#allocation9 + $0x18] sm:$0xff]
    %v237 = vld [vmem:[#allocation2] sm:$0xff]
    %v238 = vld [vmem:[#allocation3] sm:$0xff]
    %vm239 = vcmask 261120
    %v241 = vsel %vm239, %v237, 0
    %243 = vmatprep.subr.mxu0 0.0
    %244 = vmatpush1.msra.mxu0 %v233
    %245 = vmatprep.subr.mxu0 0.0
    %246 = vmatpush1.msra.mxu0 %v234
    %247 = vmatprep.subr.mxu0 0.0
    %248 = vmatpush1.msra.mxu0 %v235
    %249 = vmatprep.subr.mxu0 0.0
    %250 = vmatpush1.msra.mxu0 %v236
    %251 = vmatprep.subr.mxu0 0.0
    %252 = vmatpush1.msra.mxu0 0.0
    %253 = vmatprep.subr.mxu0 0.0
    %254 = vmatpush1.msra.mxu0 0.0
    %255 = vmatprep.subr.mxu0 0.0
    %256 = vmatpush1.msra.mxu0 0.0
    %257 = vmatprep.subr.mxu0 0.0
    %258 = vmatpush1.msra.mxu0 0.0
    %259 = vmatprep.subr.mxu0 0.0
    %260 = vmatpush1.msra.mxu0 0.0
    %261 = vmatprep.subr.mxu0 0.0
    %262 = vmatpush1.msra.mxu0 0.0
    %263 = vmatprep.subr.mxu0 0.0
    %264 = vmatpush1.msra.mxu0 0.0
    %265 = vmatprep.subr.mxu0 0.0
    %266 = vmatpush1.msra.mxu0 0.0
    %267 = vmatprep.subr.mxu0 0.0
    %268 = vmatpush1.msra.mxu0 0.0
    %269 = vmatprep.subr.mxu0 0.0
    %270 = vmatpush1.msra.mxu0 0.0
    %271 = vmatprep.subr.mxu0 0.0
    %272 = vmatpush1.msra.mxu0 0.0
    %273 = vmatprep.subr.mxu0 0.0
    %274 = vmatpush1.msra.mxu0 0.0
    %275 = vmatprep.subr.mxu0 0.0
    %276 = vmatpush1.msra.mxu0 0.0
    %277 = vmatprep.subr.mxu0 0.0
    %278 = vmatpush1.msra.mxu0 0.0
    %279 = vmatprep.subr.mxu0 0.0
    %280 = vmatpush1.msra.mxu0 0.0
    %281 = vmatprep.subr.mxu0 0.0
    %282 = vmatpush1.msra.mxu0 0.0
    %283 = vmatprep.subr.mxu0 0.0
    %284 = vmatpush1.msra.mxu0 0.0
    %285 = vmatprep.subr.mxu0 0.0
    %286 = vmatpush1.msra.mxu0 0.0
    %287 = vmatprep.subr.mxu0 0.0
    %288 = vmatpush1.msra.mxu0 0.0
    %289 = vmatprep.subr.mxu0 0.0
    %290 = vmatpush1.msra.mxu0 0.0
    %291 = vmatprep.subr.mxu0 0.0
    %292 = vmatpush1.msra.mxu0 0.0
    %293 = vmatprep.subr.mxu0 0.0
    %294 = vmatpush1.msra.mxu0 0.0
    %295 = vmatprep.subr.mxu0 0.0
    %296 = vmatpush1.msra.mxu0 0.0
    %297 = vmatprep.subr.mxu0 0.0
    %298 = vmatpush1.msra.mxu0 0.0
    %299 = vmatprep.subr.mxu0 0.0
    %300 = vmatpush1.msra.mxu0 0.0
    %301 = vmatprep.subr.mxu0 0.0
    %302 = vmatpush1.msra.mxu0 0.0
    %303 = vmatprep.subr.mxu0 0.0
    %304 = vmatpush1.msra.mxu0 0.0
    %305 = vmatprep.subr.mxu0 0.0
    %306 = vmatpush1.msra.mxu0 0.0
    %307 = vmatprep.mubr.f32.mxu0 0.0
    %308 = vmatmul.mubr.f32.gmra.mrb[0].mxu0 %v241
    %v309 = vpop.f32.mrb[0].mxu0
    %v310 = vadd.f32 0.0, %v309
    %v311 = vpop.f32.mrb[0].mxu0
    %312 = vdwg.mxu0
    %v314 = vrot.slane %v310, 1
    %v315 = vrot.slane %v310, 2
    %v316 = vrot.slane %v310, 3
    %v317 = vrot.slane %v310, 4
    %v318 = vrot.slane %v310, 5
    %v319 = vrot.slane %v310, 6
    %v320 = vrot.slane %v310, 7
    %v329 = vadd.f32 %v195, %v310
    %v330 = vadd.f32 %v200, %v314
    %v331 = vadd.f32 %v205, %v315
    %v332 = vadd.f32 %v210, %v316
    %v333 = vadd.f32 %v215, %v317
    %v334 = vadd.f32 %v220, %v318
    %v335 = vadd.f32 %v225, %v319
    %v336 = vadd.f32 %v230, %v320
    %v337 = vxor.u32 %v329, 2147483648
    %v338 = vxor.u32 %v330, 2147483648
    %v339 = vxor.u32 %v331, 2147483648
    %v340 = vxor.u32 %v332, 2147483648
    %v341 = vxor.u32 %v333, 2147483648
    %v342 = vxor.u32 %v334, 2147483648
    %v343 = vxor.u32 %v335, 2147483648
    %v344 = vxor.u32 %v336, 2147483648
    %v345 = vmul.f32 %v337, 1.442695
    %v346 = vpow.pop %v345
    %v347 = vmul.f32 %v338, 1.442695
    %v348 = vpow.pop %v347
    %v349 = vmul.f32 %v339, 1.442695
    %v350 = vpow.pop %v349
    %v351 = vmul.f32 %v340, 1.442695
    %v352 = vpow.pop %v351
    %v353 = vmul.f32 %v341, 1.442695
    %v354 = vpow.pop %v353
    %v355 = vmul.f32 %v342, 1.442695
    %v356 = vpow.pop %v355
    %v357 = vmul.f32 %v343, 1.442695
    %v358 = vpow.pop %v357
    %v359 = vmul.f32 %v344, 1.442695
    %v360 = vpow.pop %v359
    %v361 = vadd.f32 %v346, 1.0
    %v362 = vadd.f32 %v348, 1.0
    %v363 = vadd.f32 %v350, 1.0
    %v364 = vadd.f32 %v352, 1.0
    %v365 = vadd.f32 %v354, 1.0
    %v366 = vadd.f32 %v356, 1.0
    %v367 = vadd.f32 %v358, 1.0
    %v368 = vadd.f32 %v360, 1.0
    %v369 = vrcp.pop %v361
    %v370 = vmul.f32 1.0, %v369
    %v371 = vrcp.pop %v362
    %v372 = vmul.f32 1.0, %v371
    %v373 = vrcp.pop %v363
    %v374 = vmul.f32 1.0, %v373
    %v375 = vrcp.pop %v364
    %v376 = vmul.f32 1.0, %v375
    %v377 = vrcp.pop %v365
    %v378 = vmul.f32 1.0, %v377
    %v379 = vrcp.pop %v366
    %v380 = vmul.f32 1.0, %v379
    %v381 = vrcp.pop %v367
    %v382 = vmul.f32 1.0, %v381
    %v383 = vrcp.pop %v368
    %v384 = vmul.f32 1.0, %v383
    %v385 = vtanh.pop %v329
    %v386 = vtanh.pop %v330
    %v387 = vtanh.pop %v331
    %v388 = vtanh.pop %v332
    %v389 = vtanh.pop %v333
    %v390 = vtanh.pop %v334
    %v391 = vtanh.pop %v335
    %v392 = vtanh.pop %v336
    %v394 = vrot.slane %v238, 1
    %v395 = vrot.slane %v238, 2
    %v396 = vrot.slane %v238, 3
    %v397 = vrot.slane %v238, 4
    %v398 = vrot.slane %v238, 5
    %v399 = vrot.slane %v238, 6
    %v400 = vrot.slane %v238, 7
    %401 = vrot.lane.b32.xlu0 %v238, 32
    %v402 = vpop.permute.xlu0 %401
    %403 = vrot.lane.b32.xlu0 %v394, 32
    %v404 = vpop.permute.xlu0 %403
    %405 = vrot.lane.b32.xlu0 %v395, 32
    %v406 = vpop.permute.xlu0 %405
    %407 = vrot.lane.b32.xlu0 %v396, 32
    %v408 = vpop.permute.xlu0 %407
    %409 = vrot.lane.b32.xlu0 %v397, 32
    %v410 = vpop.permute.xlu0 %409
    %411 = vrot.lane.b32.xlu0 %v398, 32
    %v412 = vpop.permute.xlu0 %411
    %413 = vrot.lane.b32.xlu0 %v399, 32
    %v414 = vpop.permute.xlu0 %413
    %415 = vrot.lane.b32.xlu0 %v400, 32
    %v416 = vpop.permute.xlu0 %415
    %v425 = vmul.f32 %v370, %v402
    %v426 = vmul.f32 %v372, %v404
    %v427 = vmul.f32 %v374, %v406
    %v428 = vmul.f32 %v376, %v408
    %v429 = vmul.f32 %v378, %v410
    %v430 = vmul.f32 %v380, %v412
    %v431 = vmul.f32 %v382, %v414
    %v432 = vmul.f32 %v384, %v416
    %441 = vrot.lane.b32.xlu0 %v385, 32
    %v442 = vpop.permute.xlu0 %441
    %443 = vrot.lane.b32.xlu0 %v386, 32
    %v444 = vpop.permute.xlu0 %443
    %445 = vrot.lane.b32.xlu0 %v387, 32
    %v446 = vpop.permute.xlu0 %445
    %447 = vrot.lane.b32.xlu0 %v388, 32
    %v448 = vpop.permute.xlu0 %447
    %449 = vrot.lane.b32.xlu0 %v389, 32
    %v450 = vpop.permute.xlu0 %449
    %451 = vrot.lane.b32.xlu0 %v390, 32
    %v452 = vpop.permute.xlu0 %451
    %453 = vrot.lane.b32.xlu0 %v391, 32
    %v454 = vpop.permute.xlu0 %453
    %455 = vrot.lane.b32.xlu0 %v392, 32
    %v456 = vpop.permute.xlu0 %455
    %v465 = vmul.f32 %v370, %v442
    %v466 = vmul.f32 %v372, %v444
    %v467 = vmul.f32 %v374, %v446
    %v468 = vmul.f32 %v376, %v448
    %v469 = vmul.f32 %v378, %v450
    %v470 = vmul.f32 %v380, %v452
    %v471 = vmul.f32 %v382, %v454
    %v472 = vmul.f32 %v384, %v456
    %481 = vrot.lane.b32.xlu0 %v465, 32
    %v482 = vpop.permute.xlu0 %481
    %483 = vrot.lane.b32.xlu0 %v466, 32
    %v484 = vpop.permute.xlu0 %483
    %485 = vrot.lane.b32.xlu0 %v467, 32
    %v486 = vpop.permute.xlu0 %485
    %487 = vrot.lane.b32.xlu0 %v468, 32
    %v488 = vpop.permute.xlu0 %487
    %489 = vrot.lane.b32.xlu0 %v469, 32
    %v490 = vpop.permute.xlu0 %489
    %491 = vrot.lane.b32.xlu0 %v470, 32
    %v492 = vpop.permute.xlu0 %491
    %493 = vrot.lane.b32.xlu0 %v471, 32
    %v494 = vpop.permute.xlu0 %493
    %495 = vrot.lane.b32.xlu0 %v472, 32
    %v496 = vpop.permute.xlu0 %495
    %v505 = vadd.f32 %v425, %v482
    %v506 = vadd.f32 %v426, %v484
    %v507 = vadd.f32 %v427, %v486
    %v508 = vadd.f32 %v428, %v488
    %v509 = vadd.f32 %v429, %v490
    %v510 = vadd.f32 %v430, %v492
    %v511 = vadd.f32 %v431, %v494
    %v512 = vadd.f32 %v432, %v496
    %v513 = vtanh.pop %v505
    %v514 = vtanh.pop %v506
    %v515 = vtanh.pop %v507
    %v516 = vtanh.pop %v508
    %v517 = vtanh.pop %v509
    %v518 = vtanh.pop %v510
    %v519 = vtanh.pop %v511
    %v520 = vtanh.pop %v512
    %529 = vrot.lane.b32.xlu0 %v513, 32
    %v530 = vpop.permute.xlu0 %529
    %531 = vrot.lane.b32.xlu0 %v514, 32
    %v532 = vpop.permute.xlu0 %531
    %533 = vrot.lane.b32.xlu0 %v515, 32
    %v534 = vpop.permute.xlu0 %533
    %535 = vrot.lane.b32.xlu0 %v516, 32
    %v536 = vpop.permute.xlu0 %535
    %537 = vrot.lane.b32.xlu0 %v517, 32
    %v538 = vpop.permute.xlu0 %537
    %539 = vrot.lane.b32.xlu0 %v518, 32
    %v540 = vpop.permute.xlu0 %539
    %541 = vrot.lane.b32.xlu0 %v519, 32
    %v542 = vpop.permute.xlu0 %541
    %543 = vrot.lane.b32.xlu0 %v520, 32
    %v544 = vpop.permute.xlu0 %543
    %v553 = vmul.f32 %v370, %v530
    %v554 = vmul.f32 %v372, %v532
    %v555 = vmul.f32 %v374, %v534
    %v556 = vmul.f32 %v376, %v536
    %v557 = vmul.f32 %v378, %v538
    %v558 = vmul.f32 %v380, %v540
    %v559 = vmul.f32 %v382, %v542
    %v560 = vmul.f32 %v384, %v544
    %v569 = vrot.slane %v554, 7
    %vm570 = vcmask 1041409
    %v571 = vsel %vm570, %v569, %v553
    %v572 = vrot.slane %v555, 6
    %vm573 = vcmask 1042434
    %v574 = vsel %vm573, %v572, %v571
    %v575 = vrot.slane %v556, 5
    %vm576 = vcmask 1043459
    %v577 = vsel %vm576, %v575, %v574
    %v578 = vrot.slane %v557, 4
    %vm579 = vcmask 1044484
    %v580 = vsel %vm579, %v578, %v577
    %v581 = vrot.slane %v558, 3
    %vm582 = vcmask 1045509
    %v583 = vsel %vm582, %v581, %v580
    %v584 = vrot.slane %v559, 2
    %vm585 = vcmask 1046534
    %v586 = vsel %vm585, %v584, %v583
    %v587 = vrot.slane %v560, 1
    %vm588 = vcmask 1047559
    %v589 = vsel %vm588, %v587, %v586
    %590 = vrot.lane.b32.xlu0 %v589, 64
    %v591 = vpop.permute.xlu0 %590
    %v592 = vsel %vm239, %v591, 0
    %594 = vmatprep.subr.mxu0 0.0
    %595 = vmatpush1.msra.mxu0 %v233
    %596 = vmatprep.subr.mxu0 0.0
    %597 = vmatpush1.msra.mxu0 %v234
    %598 = vmatprep.subr.mxu0 0.0
    %599 = vmatpush1.msra.mxu0 %v235
    %600 = vmatprep.subr.mxu0 0.0
    %601 = vmatpush1.msra.mxu0 %v236
    %602 = vmatprep.subr.mxu0 0.0
    %603 = vmatpush1.msra.mxu0 0.0
    %604 = vmatprep.subr.mxu0 0.0
    %605 = vmatpush1.msra.mxu0 0.0
    %606 = vmatprep.subr.mxu0 0.0
    %607 = vmatpush1.msra.mxu0 0.0
    %608 = vmatprep.subr.mxu0 0.0
    %609 = vmatpush1.msra.mxu0 0.0
    %610 = vmatprep.subr.mxu0 0.0
    %611 = vmatpush1.msra.mxu0 0.0
    %612 = vmatprep.subr.mxu0 0.0
    %613 = vmatpush1.msra.mxu0 0.0
    %614 = vmatprep.subr.mxu0 0.0
    %615 = vmatpush1.msra.mxu0 0.0
    %616 = vmatprep.subr.mxu0 0.0
    %617 = vmatpush1.msra.mxu0 0.0
    %618 = vmatprep.subr.mxu0 0.0
    %619 = vmatpush1.msra.mxu0 0.0
    %620 = vmatprep.subr.mxu0 0.0
    %621 = vmatpush1.msra.mxu0 0.0
    %622 = vmatprep.subr.mxu0 0.0
    %623 = vmatpush1.msra.mxu0 0.0
    %624 = vmatprep.subr.mxu0 0.0
    %625 = vmatpush1.msra.mxu0 0.0
    %626 = vmatprep.subr.mxu0 0.0
    %627 = vmatpush1.msra.mxu0 0.0
    %628 = vmatprep.subr.mxu0 0.0
    %629 = vmatpush1.msra.mxu0 0.0
    %630 = vmatprep.subr.mxu0 0.0
    %631 = vmatpush1.msra.mxu0 0.0
    %632 = vmatprep.subr.mxu0 0.0
    %633 = vmatpush1.msra.mxu0 0.0
    %634 = vmatprep.subr.mxu0 0.0
    %635 = vmatpush1.msra.mxu0 0.0
    %636 = vmatprep.subr.mxu0 0.0
    %637 = vmatpush1.msra.mxu0 0.0
    %638 = vmatprep.subr.mxu0 0.0
    %639 = vmatpush1.msra.mxu0 0.0
    %640 = vmatprep.subr.mxu0 0.0
    %641 = vmatpush1.msra.mxu0 0.0
    %642 = vmatprep.subr.mxu0 0.0
    %643 = vmatpush1.msra.mxu0 0.0
    %644 = vmatprep.subr.mxu0 0.0
    %645 = vmatpush1.msra.mxu0 0.0
    %646 = vmatprep.subr.mxu0 0.0
    %647 = vmatpush1.msra.mxu0 0.0
    %648 = vmatprep.subr.mxu0 0.0
    %649 = vmatpush1.msra.mxu0 0.0
    %650 = vmatprep.subr.mxu0 0.0
    %651 = vmatpush1.msra.mxu0 0.0
    %652 = vmatprep.subr.mxu0 0.0
    %653 = vmatpush1.msra.mxu0 0.0
    %654 = vmatprep.subr.mxu0 0.0
    %655 = vmatpush1.msra.mxu0 0.0
    %656 = vmatprep.subr.mxu0 0.0
    %657 = vmatpush1.msra.mxu0 0.0
    %658 = vmatprep.mubr.f32.mxu0 0.0
    %659 = vmatmul.mubr.f32.gmra.mrb[0].mxu0 %v592
    %v660 = vpop.f32.mrb[0].mxu0
    %v661 = vadd.f32 0.0, %v660
    %v662 = vpop.f32.mrb[0].mxu0
    %663 = vdwg.mxu0
    %v665 = vrot.slane %v661, 7
    %v666 = vrot.slane %v661, 1
    %v667 = vrot.slane %v661, 2
    %v668 = vrot.slane %v661, 3
    %v669 = vrot.slane %v661, 4
    %v670 = vrot.slane %v661, 5
    %v671 = vrot.slane %v661, 6
    %v680 = vadd.f32 %v195, %v665
    %v681 = vadd.f32 %v200, %v661
    %v682 = vadd.f32 %v205, %v666
    %v683 = vadd.f32 %v210, %v667
    %v684 = vadd.f32 %v215, %v668
    %v685 = vadd.f32 %v220, %v669
    %v686 = vadd.f32 %v225, %v670
    %v687 = vadd.f32 %v230, %v671
    %v688 = vxor.u32 %v680, 2147483648
    %v689 = vxor.u32 %v681, 2147483648
    %v690 = vxor.u32 %v682, 2147483648
    %v691 = vxor.u32 %v683, 2147483648
    %v692 = vxor.u32 %v684, 2147483648
    %v693 = vxor.u32 %v685, 2147483648
    %v694 = vxor.u32 %v686, 2147483648
    %v695 = vxor.u32 %v687, 2147483648
    %v696 = vmul.f32 %v688, 1.442695
    %v697 = vpow.pop %v696
    %v698 = vmul.f32 %v689, 1.442695
    %v699 = vpow.pop %v698
    %v700 = vmul.f32 %v690, 1.442695
    %v701 = vpow.pop %v700
    %v702 = vmul.f32 %v691, 1.442695
    %v703 = vpow.pop %v702
    %v704 = vmul.f32 %v692, 1.442695
    %v705 = vpow.pop %v704
    %v706 = vmul.f32 %v693, 1.442695
    %v707 = vpow.pop %v706
    %v708 = vmul.f32 %v694, 1.442695
    %v709 = vpow.pop %v708
    %v710 = vmul.f32 %v695, 1.442695
    %v711 = vpow.pop %v710
    %v712 = vadd.f32 %v697, 1.0
    %v713 = vadd.f32 %v699, 1.0
    %v714 = vadd.f32 %v701, 1.0
    %v715 = vadd.f32 %v703, 1.0
    %v716 = vadd.f32 %v705, 1.0
    %v717 = vadd.f32 %v707, 1.0
    %v718 = vadd.f32 %v709, 1.0
    %v719 = vadd.f32 %v711, 1.0
    %v720 = vrcp.pop %v712
    %v721 = vmul.f32 1.0, %v720
    %v722 = vrcp.pop %v713
    %v723 = vmul.f32 1.0, %v722
    %v724 = vrcp.pop %v714
    %v725 = vmul.f32 1.0, %v724
    %v726 = vrcp.pop %v715
    %v727 = vmul.f32 1.0, %v726
    %v728 = vrcp.pop %v716
    %v729 = vmul.f32 1.0, %v728
    %v730 = vrcp.pop %v717
    %v731 = vmul.f32 1.0, %v730
    %v732 = vrcp.pop %v718
    %v733 = vmul.f32 1.0, %v732
    %v734 = vrcp.pop %v719
    %v735 = vmul.f32 1.0, %v734
    %v736 = vtanh.pop %v680
    %v737 = vtanh.pop %v681
    %v738 = vtanh.pop %v682
    %v739 = vtanh.pop %v683
    %v740 = vtanh.pop %v684
    %v741 = vtanh.pop %v685
    %v742 = vtanh.pop %v686
    %v743 = vtanh.pop %v687
    %v752 = vrot.slane %v505, 7
    %v753 = vrot.slane %v506, 7
    %v754 = vrot.slane %v507, 7
    %v755 = vrot.slane %v508, 7
    %v756 = vrot.slane %v509, 7
    %v757 = vrot.slane %v510, 7
    %v758 = vrot.slane %v511, 7
    %v759 = vrot.slane %v512, 7
    %v768 = vmul.f32 %v721, %v752
    %v769 = vmul.f32 %v723, %v753
    %v770 = vmul.f32 %v725, %v754
    %v771 = vmul.f32 %v727, %v755
    %v772 = vmul.f32 %v729, %v756
    %v773 = vmul.f32 %v731, %v757
    %v774 = vmul.f32 %v733, %v758
    %v775 = vmul.f32 %v735, %v759
    %784 = vrot.lane.b32.xlu0 %v736, 32
    %v785 = vpop.permute.xlu0 %784
    %786 = vrot.lane.b32.xlu0 %v737, 32
    %v787 = vpop.permute.xlu0 %786
    %788 = vrot.lane.b32.xlu0 %v738, 32
    %v789 = vpop.permute.xlu0 %788
    %790 = vrot.lane.b32.xlu0 %v739, 32
    %v791 = vpop.permute.xlu0 %790
    %792 = vrot.lane.b32.xlu0 %v740, 32
    %v793 = vpop.permute.xlu0 %792
    %794 = vrot.lane.b32.xlu0 %v741, 32
    %v795 = vpop.permute.xlu0 %794
    %796 = vrot.lane.b32.xlu0 %v742, 32
    %v797 = vpop.permute.xlu0 %796
    %798 = vrot.lane.b32.xlu0 %v743, 32
    %v799 = vpop.permute.xlu0 %798
    %v808 = vmul.f32 %v721, %v785
    %v809 = vmul.f32 %v723, %v787
    %v810 = vmul.f32 %v725, %v789
    %v811 = vmul.f32 %v727, %v791
    %v812 = vmul.f32 %v729, %v793
    %v813 = vmul.f32 %v731, %v795
    %v814 = vmul.f32 %v733, %v797
    %v815 = vmul.f32 %v735, %v799
    %824 = vrot.lane.b32.xlu0 %v808, 32
    %v825 = vpop.permute.xlu0 %824
    %826 = vrot.lane.b32.xlu0 %v809, 32
    %v827 = vpop.permute.xlu0 %826
    %828 = vrot.lane.b32.xlu0 %v810, 32
    %v829 = vpop.permute.xlu0 %828
    %830 = vrot.lane.b32.xlu0 %v811, 32
    %v831 = vpop.permute.xlu0 %830
    %832 = vrot.lane.b32.xlu0 %v812, 32
    %v833 = vpop.permute.xlu0 %832
    %834 = vrot.lane.b32.xlu0 %v813, 32
    %v835 = vpop.permute.xlu0 %834
    %836 = vrot.lane.b32.xlu0 %v814, 32
    %v837 = vpop.permute.xlu0 %836
    %838 = vrot.lane.b32.xlu0 %v815, 32
    %v839 = vpop.permute.xlu0 %838
    %v848 = vadd.f32 %v768, %v825
    %v849 = vadd.f32 %v769, %v827
    %v850 = vadd.f32 %v770, %v829
    %v851 = vadd.f32 %v771, %v831
    %v852 = vadd.f32 %v772, %v833
    %v853 = vadd.f32 %v773, %v835
    %v854 = vadd.f32 %v774, %v837
    %v855 = vadd.f32 %v775, %v839
    %v856 = vtanh.pop %v848
    %v857 = vtanh.pop %v849
    %v858 = vtanh.pop %v850
    %v859 = vtanh.pop %v851
    %v860 = vtanh.pop %v852
    %v861 = vtanh.pop %v853
    %v862 = vtanh.pop %v854
    %v863 = vtanh.pop %v855
    %872 = vrot.lane.b32.xlu0 %v856, 32
    %v873 = vpop.permute.xlu0 %872
    %874 = vrot.lane.b32.xlu0 %v857, 32
    %v875 = vpop.permute.xlu0 %874
    %876 = vrot.lane.b32.xlu0 %v858, 32
    %v877 = vpop.permute.xlu0 %876
    %878 = vrot.lane.b32.xlu0 %v859, 32
    %v879 = vpop.permute.xlu0 %878
    %880 = vrot.lane.b32.xlu0 %v860, 32
    %v881 = vpop.permute.xlu0 %880
    %882 = vrot.lane.b32.xlu0 %v861, 32
    %v883 = vpop.permute.xlu0 %882
    %884 = vrot.lane.b32.xlu0 %v862, 32
    %v885 = vpop.permute.xlu0 %884
    %886 = vrot.lane.b32.xlu0 %v863, 32
    %v887 = vpop.permute.xlu0 %886
    %v896 = vmul.f32 %v721, %v873
    %v897 = vmul.f32 %v723, %v875
    %v898 = vmul.f32 %v725, %v877
    %v899 = vmul.f32 %v727, %v879
    %v900 = vmul.f32 %v729, %v881
    %v901 = vmul.f32 %v731, %v883
    %v902 = vmul.f32 %v733, %v885
    %v903 = vmul.f32 %v735, %v887
    %v912 = vrot.slane %v896, 1
    %v913 = vsel %vm570, %v897, %v912
    %v914 = vrot.slane %v898, 7
    %v915 = vsel %vm573, %v914, %v913
    %v916 = vrot.slane %v899, 6
    %v917 = vsel %vm576, %v916, %v915
    %v918 = vrot.slane %v900, 5
    %v919 = vsel %vm579, %v918, %v917
    %v920 = vrot.slane %v901, 4
    %v921 = vsel %vm582, %v920, %v919
    %v922 = vrot.slane %v902, 3
    %v923 = vsel %vm585, %v922, %v921
    %v924 = vrot.slane %v903, 2
    %v925 = vsel %vm588, %v924, %v923
    %926 = vrot.lane.b32.xlu0 %v925, 64
    %v927 = vpop.permute.xlu0 %926
    %v928 = vsel %vm239, %v927, 0
    %930 = vmatprep.subr.mxu0 0.0
    %931 = vmatpush1.msra.mxu0 %v233
    %932 = vmatprep.subr.mxu0 0.0
    %933 = vmatpush1.msra.mxu0 %v234
    %934 = vmatprep.subr.mxu0 0.0
    %935 = vmatpush1.msra.mxu0 %v235
    %936 = vmatprep.subr.mxu0 0.0
    %937 = vmatpush1.msra.mxu0 %v236
    %938 = vmatprep.subr.mxu0 0.0
    %939 = vmatpush1.msra.mxu0 0.0
    %940 = vmatprep.subr.mxu0 0.0
    %941 = vmatpush1.msra.mxu0 0.0
    %942 = vmatprep.subr.mxu0 0.0
    %943 = vmatpush1.msra.mxu0 0.0
    %944 = vmatprep.subr.mxu0 0.0
    %945 = vmatpush1.msra.mxu0 0.0
    %946 = vmatprep.subr.mxu0 0.0
    %947 = vmatpush1.msra.mxu0 0.0
    %948 = vmatprep.subr.mxu0 0.0
    %949 = vmatpush1.msra.mxu0 0.0
    %950 = vmatprep.subr.mxu0 0.0
    %951 = vmatpush1.msra.mxu0 0.0
    %952 = vmatprep.subr.mxu0 0.0
    %953 = vmatpush1.msra.mxu0 0.0
    %954 = vmatprep.subr.mxu0 0.0
    %955 = vmatpush1.msra.mxu0 0.0
    %956 = vmatprep.subr.mxu0 0.0
    %957 = vmatpush1.msra.mxu0 0.0
    %958 = vmatprep.subr.mxu0 0.0
    %959 = vmatpush1.msra.mxu0 0.0
    %960 = vmatprep.subr.mxu0 0.0
    %961 = vmatpush1.msra.mxu0 0.0
    %962 = vmatprep.subr.mxu0 0.0
    %963 = vmatpush1.msra.mxu0 0.0
    %964 = vmatprep.subr.mxu0 0.0
    %965 = vmatpush1.msra.mxu0 0.0
    %966 = vmatprep.subr.mxu0 0.0
    %967 = vmatpush1.msra.mxu0 0.0
    %968 = vmatprep.subr.mxu0 0.0
    %969 = vmatpush1.msra.mxu0 0.0
    %970 = vmatprep.subr.mxu0 0.0
    %971 = vmatpush1.msra.mxu0 0.0
    %972 = vmatprep.subr.mxu0 0.0
    %973 = vmatpush1.msra.mxu0 0.0
    %974 = vmatprep.subr.mxu0 0.0
    %975 = vmatpush1.msra.mxu0 0.0
    %976 = vmatprep.subr.mxu0 0.0
    %977 = vmatpush1.msra.mxu0 0.0
    %978 = vmatprep.subr.mxu0 0.0
    %979 = vmatpush1.msra.mxu0 0.0
    %980 = vmatprep.subr.mxu0 0.0
    %981 = vmatpush1.msra.mxu0 0.0
    %982 = vmatprep.subr.mxu0 0.0
    %983 = vmatpush1.msra.mxu0 0.0
    %984 = vmatprep.subr.mxu0 0.0
    %985 = vmatpush1.msra.mxu0 0.0
    %986 = vmatprep.subr.mxu0 0.0
    %987 = vmatpush1.msra.mxu0 0.0
    %988 = vmatprep.subr.mxu0 0.0
    %989 = vmatpush1.msra.mxu0 0.0
    %990 = vmatprep.subr.mxu0 0.0
    %991 = vmatpush1.msra.mxu0 0.0
    %992 = vmatprep.subr.mxu0 0.0
    %993 = vmatpush1.msra.mxu0 0.0
    %994 = vmatprep.mubr.f32.mxu0 0.0
    %995 = vmatmul.mubr.f32.gmra.mrb[0].mxu0 %v928
    %v996 = vpop.f32.mrb[0].mxu0
    %v997 = vadd.f32 0.0, %v996
    %v998 = vpop.f32.mrb[0].mxu0
    %999 = vdwg.mxu0
    %v1001 = vrot.slane %v997, 6
    %v1002 = vrot.slane %v997, 7
    %v1003 = vrot.slane %v997, 1
    %v1004 = vrot.slane %v997, 2
    %v1005 = vrot.slane %v997, 3
    %v1006 = vrot.slane %v997, 4
    %v1007 = vrot.slane %v997, 5
    %v1016 = vadd.f32 %v195, %v1001
    %v1017 = vadd.f32 %v200, %v1002
    %v1018 = vadd.f32 %v205, %v997
    %v1019 = vadd.f32 %v210, %v1003
    %v1020 = vadd.f32 %v215, %v1004
    %v1021 = vadd.f32 %v220, %v1005
    %v1022 = vadd.f32 %v225, %v1006
    %v1023 = vadd.f32 %v230, %v1007
    %v1024 = vxor.u32 %v1016, 2147483648
    %v1025 = vxor.u32 %v1017, 2147483648
    %v1026 = vxor.u32 %v1018, 2147483648
    %v1027 = vxor.u32 %v1019, 2147483648
    %v1028 = vxor.u32 %v1020, 2147483648
    %v1029 = vxor.u32 %v1021, 2147483648
    %v1030 = vxor.u32 %v1022, 2147483648
    %v1031 = vxor.u32 %v1023, 2147483648
    %v1032 = vmul.f32 %v1024, 1.442695
    %v1033 = vpow.pop %v1032
    %v1034 = vmul.f32 %v1025, 1.442695
    %v1035 = vpow.pop %v1034
    %v1036 = vmul.f32 %v1026, 1.442695
    %v1037 = vpow.pop %v1036
    %v1038 = vmul.f32 %v1027, 1.442695
    %v1039 = vpow.pop %v1038
    %v1040 = vmul.f32 %v1028, 1.442695
    %v1041 = vpow.pop %v1040
    %v1042 = vmul.f32 %v1029, 1.442695
    %v1043 = vpow.pop %v1042
    %v1044 = vmul.f32 %v1030, 1.442695
    %v1045 = vpow.pop %v1044
    %v1046 = vmul.f32 %v1031, 1.442695
    %v1047 = vpow.pop %v1046
    %v1048 = vadd.f32 %v1033, 1.0
    %v1049 = vadd.f32 %v1035, 1.0
    %v1050 = vadd.f32 %v1037, 1.0
    %v1051 = vadd.f32 %v1039, 1.0
    %v1052 = vadd.f32 %v1041, 1.0
    %v1053 = vadd.f32 %v1043, 1.0
    %v1054 = vadd.f32 %v1045, 1.0
    %v1055 = vadd.f32 %v1047, 1.0
    %v1056 = vrcp.pop %v1048
    %v1057 = vmul.f32 1.0, %v1056
    %v1058 = vrcp.pop %v1049
    %v1059 = vmul.f32 1.0, %v1058
    %v1060 = vrcp.pop %v1050
    %v1061 = vmul.f32 1.0, %v1060
    %v1062 = vrcp.pop %v1051
    %v1063 = vmul.f32 1.0, %v1062
    %v1064 = vrcp.pop %v1052
    %v1065 = vmul.f32 1.0, %v1064
    %v1066 = vrcp.pop %v1053
    %v1067 = vmul.f32 1.0, %v1066
    %v1068 = vrcp.pop %v1054
    %v1069 = vmul.f32 1.0, %v1068
    %v1070 = vrcp.pop %v1055
    %v1071 = vmul.f32 1.0, %v1070
    %v1072 = vtanh.pop %v1016
    %v1073 = vtanh.pop %v1017
    %v1074 = vtanh.pop %v1018
    %v1075 = vtanh.pop %v1019
    %v1076 = vtanh.pop %v1020
    %v1077 = vtanh.pop %v1021
    %v1078 = vtanh.pop %v1022
    %v1079 = vtanh.pop %v1023
    %v1088 = vrot.slane %v848, 7
    %v1089 = vrot.slane %v849, 7
    %v1090 = vrot.slane %v850, 7
    %v1091 = vrot.slane %v851, 7
    %v1092 = vrot.slane %v852, 7
    %v1093 = vrot.slane %v853, 7
    %v1094 = vrot.slane %v854, 7
    %v1095 = vrot.slane %v855, 7
    %v1104 = vmul.f32 %v1057, %v1088
    %v1105 = vmul.f32 %v1059, %v1089
    %v1106 = vmul.f32 %v1061, %v1090
    %v1107 = vmul.f32 %v1063, %v1091
    %v1108 = vmul.f32 %v1065, %v1092
    %v1109 = vmul.f32 %v1067, %v1093
    %v1110 = vmul.f32 %v1069, %v1094
    %v1111 = vmul.f32 %v1071, %v1095
    %1120 = vrot.lane.b32.xlu0 %v1072, 32
    %v1121 = vpop.permute.xlu0 %1120
    %1122 = vrot.lane.b32.xlu0 %v1073, 32
    %v1123 = vpop.permute.xlu0 %1122
    %1124 = vrot.lane.b32.xlu0 %v1074, 32
    %v1125 = vpop.permute.xlu0 %1124
    %1126 = vrot.lane.b32.xlu0 %v1075, 32
    %v1127 = vpop.permute.xlu0 %1126
    %1128 = vrot.lane.b32.xlu0 %v1076, 32
    %v1129 = vpop.permute.xlu0 %1128
    %1130 = vrot.lane.b32.xlu0 %v1077, 32
    %v1131 = vpop.permute.xlu0 %1130
    %1132 = vrot.lane.b32.xlu0 %v1078, 32
    %v1133 = vpop.permute.xlu0 %1132
    %1134 = vrot.lane.b32.xlu0 %v1079, 32
    %v1135 = vpop.permute.xlu0 %1134
    %v1144 = vmul.f32 %v1057, %v1121
    %v1145 = vmul.f32 %v1059, %v1123
    %v1146 = vmul.f32 %v1061, %v1125
    %v1147 = vmul.f32 %v1063, %v1127
    %v1148 = vmul.f32 %v1065, %v1129
    %v1149 = vmul.f32 %v1067, %v1131
    %v1150 = vmul.f32 %v1069, %v1133
    %v1151 = vmul.f32 %v1071, %v1135
    %1160 = vrot.lane.b32.xlu0 %v1144, 32
    %v1161 = vpop.permute.xlu0 %1160
    %1162 = vrot.lane.b32.xlu0 %v1145, 32
    %v1163 = vpop.permute.xlu0 %1162
    %1164 = vrot.lane.b32.xlu0 %v1146, 32
    %v1165 = vpop.permute.xlu0 %1164
    %1166 = vrot.lane.b32.xlu0 %v1147, 32
    %v1167 = vpop.permute.xlu0 %1166
    %1168 = vrot.lane.b32.xlu0 %v1148, 32
    %v1169 = vpop.permute.xlu0 %1168
    %1170 = vrot.lane.b32.xlu0 %v1149, 32
    %v1171 = vpop.permute.xlu0 %1170
    %1172 = vrot.lane.b32.xlu0 %v1150, 32
    %v1173 = vpop.permute.xlu0 %1172
    %1174 = vrot.lane.b32.xlu0 %v1151, 32
    %v1175 = vpop.permute.xlu0 %1174
    %v1184 = vadd.f32 %v1104, %v1161
    %v1185 = vadd.f32 %v1105, %v1163
    %v1186 = vadd.f32 %v1106, %v1165
    %v1187 = vadd.f32 %v1107, %v1167
    %v1188 = vadd.f32 %v1108, %v1169
    %v1189 = vadd.f32 %v1109, %v1171
    %v1190 = vadd.f32 %v1110, %v1173
    %v1191 = vadd.f32 %v1111, %v1175
    %v1192 = vtanh.pop %v1184
    %v1193 = vtanh.pop %v1185
    %v1194 = vtanh.pop %v1186
    %v1195 = vtanh.pop %v1187
    %v1196 = vtanh.pop %v1188
    %v1197 = vtanh.pop %v1189
    %v1198 = vtanh.pop %v1190
    %v1199 = vtanh.pop %v1191
    %1208 = vrot.lane.b32.xlu0 %v1192, 32
    %v1209 = vpop.permute.xlu0 %1208
    %1210 = vrot.lane.b32.xlu0 %v1193, 32
    %v1211 = vpop.permute.xlu0 %1210
    %1212 = vrot.lane.b32.xlu0 %v1194, 32
    %v1213 = vpop.permute.xlu0 %1212
    %1214 = vrot.lane.b32.xlu0 %v1195, 32
    %v1215 = vpop.permute.xlu0 %1214
    %1216 = vrot.lane.b32.xlu0 %v1196, 32
    %v1217 = vpop.permute.xlu0 %1216
    %1218 = vrot.lane.b32.xlu0 %v1197, 32
    %v1219 = vpop.permute.xlu0 %1218
    %1220 = vrot.lane.b32.xlu0 %v1198, 32
    %v1221 = vpop.permute.xlu0 %1220
    %1222 = vrot.lane.b32.xlu0 %v1199, 32
    %v1223 = vpop.permute.xlu0 %1222
    %v1232 = vmul.f32 %v1057, %v1209
    %v1233 = vmul.f32 %v1059, %v1211
    %v1234 = vmul.f32 %v1061, %v1213
    %v1235 = vmul.f32 %v1063, %v1215
    %v1236 = vmul.f32 %v1065, %v1217
    %v1237 = vmul.f32 %v1067, %v1219
    %v1238 = vmul.f32 %v1069, %v1221
    %v1239 = vmul.f32 %v1071, %v1223
    %v1248 = vrot.slane %v1232, 2
    %v1249 = vrot.slane %v1233, 1
    %v1250 = vsel %vm570, %v1249, %v1248
    %v1251 = vsel %vm573, %v1234, %v1250
    %v1252 = vrot.slane %v1235, 7
    %v1253 = vsel %vm576, %v1252, %v1251
    %v1254 = vrot.slane %v1236, 6
    %v1255 = vsel %vm579, %v1254, %v1253
    %v1256 = vrot.slane %v1237, 5
    %v1257 = vsel %vm582, %v1256, %v1255
    %v1258 = vrot.slane %v1238, 4
    %v1259 = vsel %vm585, %v1258, %v1257
    %v1260 = vrot.slane %v1239, 3
    %v1261 = vsel %vm588, %v1260, %v1259
    %1262 = vrot.lane.b32.xlu0 %v1261, 64
    %v1263 = vpop.permute.xlu0 %1262
    %v1264 = vsel %vm239, %v1263, 0
    %1266 = vmatprep.subr.mxu0 0.0
    %1267 = vmatpush1.msra.mxu0 %v233
    %1268 = vmatprep.subr.mxu0 0.0
    %1269 = vmatpush1.msra.mxu0 %v234
    %1270 = vmatprep.subr.mxu0 0.0
    %1271 = vmatpush1.msra.mxu0 %v235
    %1272 = vmatprep.subr.mxu0 0.0
    %1273 = vmatpush1.msra.mxu0 %v236
    %1274 = vmatprep.subr.mxu0 0.0
    %1275 = vmatpush1.msra.mxu0 0.0
    %1276 = vmatprep.subr.mxu0 0.0
    %1277 = vmatpush1.msra.mxu0 0.0
    %1278 = vmatprep.subr.mxu0 0.0
    %1279 = vmatpush1.msra.mxu0 0.0
    %1280 = vmatprep.subr.mxu0 0.0
    %1281 = vmatpush1.msra.mxu0 0.0
    %1282 = vmatprep.subr.mxu0 0.0
    %1283 = vmatpush1.msra.mxu0 0.0
    %1284 = vmatprep.subr.mxu0 0.0
    %1285 = vmatpush1.msra.mxu0 0.0
    %1286 = vmatprep.subr.mxu0 0.0
    %1287 = vmatpush1.msra.mxu0 0.0
    %1288 = vmatprep.subr.mxu0 0.0
    %1289 = vmatpush1.msra.mxu0 0.0
    %1290 = vmatprep.subr.mxu0 0.0
    %1291 = vmatpush1.msra.mxu0 0.0
    %1292 = vmatprep.subr.mxu0 0.0
    %1293 = vmatpush1.msra.mxu0 0.0
    %1294 = vmatprep.subr.mxu0 0.0
    %1295 = vmatpush1.msra.mxu0 0.0
    %1296 = vmatprep.subr.mxu0 0.0
    %1297 = vmatpush1.msra.mxu0 0.0
    %1298 = vmatprep.subr.mxu0 0.0
    %1299 = vmatpush1.msra.mxu0 0.0
    %1300 = vmatprep.subr.mxu0 0.0
    %1301 = vmatpush1.msra.mxu0 0.0
    %1302 = vmatprep.subr.mxu0 0.0
    %1303 = vmatpush1.msra.mxu0 0.0
    %1304 = vmatprep.subr.mxu0 0.0
    %1305 = vmatpush1.msra.mxu0 0.0
    %1306 = vmatprep.subr.mxu0 0.0
    %1307 = vmatpush1.msra.mxu0 0.0
    %1308 = vmatprep.subr.mxu0 0.0
    %1309 = vmatpush1.msra.mxu0 0.0
    %1310 = vmatprep.subr.mxu0 0.0
    %1311 = vmatpush1.msra.mxu0 0.0
    %1312 = vmatprep.subr.mxu0 0.0
    %1313 = vmatpush1.msra.mxu0 0.0
    %1314 = vmatprep.subr.mxu0 0.0
    %1315 = vmatpush1.msra.mxu0 0.0
    %1316 = vmatprep.subr.mxu0 0.0
    %1317 = vmatpush1.msra.mxu0 0.0
    %1318 = vmatprep.subr.mxu0 0.0
    %1319 = vmatpush1.msra.mxu0 0.0
    %1320 = vmatprep.subr.mxu0 0.0
    %1321 = vmatpush1.msra.mxu0 0.0
    %1322 = vmatprep.subr.mxu0 0.0
    %1323 = vmatpush1.msra.mxu0 0.0
    %1324 = vmatprep.subr.mxu0 0.0
    %1325 = vmatpush1.msra.mxu0 0.0
    %1326 = vmatprep.subr.mxu0 0.0
    %1327 = vmatpush1.msra.mxu0 0.0
    %1328 = vmatprep.subr.mxu0 0.0
    %1329 = vmatpush1.msra.mxu0 0.0
    %1330 = vmatprep.mubr.f32.mxu0 0.0
    %1331 = vmatmul.mubr.f32.gmra.mrb[0].mxu0 %v1264
    %v1332 = vpop.f32.mrb[0].mxu0
    %v1333 = vadd.f32 0.0, %v1332
    %v1334 = vpop.f32.mrb[0].mxu0
    %1335 = vdwg.mxu0
    %v1337 = vrot.slane %v1333, 5
    %v1338 = vrot.slane %v1333, 6
    %v1339 = vrot.slane %v1333, 7
    %v1340 = vrot.slane %v1333, 1
    %v1341 = vrot.slane %v1333, 2
    %v1342 = vrot.slane %v1333, 3
    %v1343 = vrot.slane %v1333, 4
    %v1352 = vadd.f32 %v195, %v1337
    %v1353 = vadd.f32 %v200, %v1338
    %v1354 = vadd.f32 %v205, %v1339
    %v1355 = vadd.f32 %v210, %v1333
    %v1356 = vadd.f32 %v215, %v1340
    %v1357 = vadd.f32 %v220, %v1341
    %v1358 = vadd.f32 %v225, %v1342
    %v1359 = vadd.f32 %v230, %v1343
    %v1360 = vxor.u32 %v1352, 2147483648
    %v1361 = vxor.u32 %v1353, 2147483648
    %v1362 = vxor.u32 %v1354, 2147483648
    %v1363 = vxor.u32 %v1355, 2147483648
    %v1364 = vxor.u32 %v1356, 2147483648
    %v1365 = vxor.u32 %v1357, 2147483648
    %v1366 = vxor.u32 %v1358, 2147483648
    %v1367 = vxor.u32 %v1359, 2147483648
    %v1368 = vmul.f32 %v1360, 1.442695
    %v1369 = vpow.pop %v1368
    %v1370 = vmul.f32 %v1361, 1.442695
    %v1371 = vpow.pop %v1370
    %v1372 = vmul.f32 %v1362, 1.442695
    %v1373 = vpow.pop %v1372
    %v1374 = vmul.f32 %v1363, 1.442695
    %v1375 = vpow.pop %v1374
    %v1376 = vmul.f32 %v1364, 1.442695
    %v1377 = vpow.pop %v1376
    %v1378 = vmul.f32 %v1365, 1.442695
    %v1379 = vpow.pop %v1378
    %v1380 = vmul.f32 %v1366, 1.442695
    %v1381 = vpow.pop %v1380
    %v1382 = vmul.f32 %v1367, 1.442695
    %v1383 = vpow.pop %v1382
    %v1384 = vadd.f32 %v1369, 1.0
    %v1385 = vadd.f32 %v1371, 1.0
    %v1386 = vadd.f32 %v1373, 1.0
    %v1387 = vadd.f32 %v1375, 1.0
    %v1388 = vadd.f32 %v1377, 1.0
    %v1389 = vadd.f32 %v1379, 1.0
    %v1390 = vadd.f32 %v1381, 1.0
    %v1391 = vadd.f32 %v1383, 1.0
    %v1392 = vrcp.pop %v1384
    %v1393 = vmul.f32 1.0, %v1392
    %v1394 = vrcp.pop %v1385
    %v1395 = vmul.f32 1.0, %v1394
    %v1396 = vrcp.pop %v1386
    %v1397 = vmul.f32 1.0, %v1396
    %v1398 = vrcp.pop %v1387
    %v1399 = vmul.f32 1.0, %v1398
    %v1400 = vrcp.pop %v1388
    %v1401 = vmul.f32 1.0, %v1400
    %v1402 = vrcp.pop %v1389
    %v1403 = vmul.f32 1.0, %v1402
    %v1404 = vrcp.pop %v1390
    %v1405 = vmul.f32 1.0, %v1404
    %v1406 = vrcp.pop %v1391
    %v1407 = vmul.f32 1.0, %v1406
    %v1408 = vtanh.pop %v1352
    %v1409 = vtanh.pop %v1353
    %v1410 = vtanh.pop %v1354
    %v1411 = vtanh.pop %v1355
    %v1412 = vtanh.pop %v1356
    %v1413 = vtanh.pop %v1357
    %v1414 = vtanh.pop %v1358
    %v1415 = vtanh.pop %v1359
    %v1424 = vrot.slane %v1184, 7
    %v1425 = vrot.slane %v1185, 7
    %v1426 = vrot.slane %v1186, 7
    %v1427 = vrot.slane %v1187, 7
    %v1428 = vrot.slane %v1188, 7
    %v1429 = vrot.slane %v1189, 7
    %v1430 = vrot.slane %v1190, 7
    %v1431 = vrot.slane %v1191, 7
    %v1440 = vmul.f32 %v1393, %v1424
    %v1441 = vmul.f32 %v1395, %v1425
    %v1442 = vmul.f32 %v1397, %v1426
    %v1443 = vmul.f32 %v1399, %v1427
    %v1444 = vmul.f32 %v1401, %v1428
    %v1445 = vmul.f32 %v1403, %v1429
    %v1446 = vmul.f32 %v1405, %v1430
    %v1447 = vmul.f32 %v1407, %v1431
    %1456 = vrot.lane.b32.xlu0 %v1408, 32
    %v1457 = vpop.permute.xlu0 %1456
    %1458 = vrot.lane.b32.xlu0 %v1409, 32
    %v1459 = vpop.permute.xlu0 %1458
    %1460 = vrot.lane.b32.xlu0 %v1410, 32
    %v1461 = vpop.permute.xlu0 %1460
    %1462 = vrot.lane.b32.xlu0 %v1411, 32
    %v1463 = vpop.permute.xlu0 %1462
    %1464 = vrot.lane.b32.xlu0 %v1412, 32
    %v1465 = vpop.permute.xlu0 %1464
    %1466 = vrot.lane.b32.xlu0 %v1413, 32
    %v1467 = vpop.permute.xlu0 %1466
    %1468 = vrot.lane.b32.xlu0 %v1414, 32
    %v1469 = vpop.permute.xlu0 %1468
    %1470 = vrot.lane.b32.xlu0 %v1415, 32
    %v1471 = vpop.permute.xlu0 %1470
    %v1480 = vmul.f32 %v1393, %v1457
    %v1481 = vmul.f32 %v1395, %v1459
    %v1482 = vmul.f32 %v1397, %v1461
    %v1483 = vmul.f32 %v1399, %v1463
    %v1484 = vmul.f32 %v1401, %v1465
    %v1485 = vmul.f32 %v1403, %v1467
    %v1486 = vmul.f32 %v1405, %v1469
    %v1487 = vmul.f32 %v1407, %v1471
    %1496 = vrot.lane.b32.xlu0 %v1480, 32
    %v1497 = vpop.permute.xlu0 %1496
    %1498 = vrot.lane.b32.xlu0 %v1481, 32
    %v1499 = vpop.permute.xlu0 %1498
    %1500 = vrot.lane.b32.xlu0 %v1482, 32
    %v1501 = vpop.permute.xlu0 %1500
    %1502 = vrot.lane.b32.xlu0 %v1483, 32
    %v1503 = vpop.permute.xlu0 %1502
    %1504 = vrot.lane.b32.xlu0 %v1484, 32
    %v1505 = vpop.permute.xlu0 %1504
    %1506 = vrot.lane.b32.xlu0 %v1485, 32
    %v1507 = vpop.permute.xlu0 %1506
    %1508 = vrot.lane.b32.xlu0 %v1486, 32
    %v1509 = vpop.permute.xlu0 %1508
    %1510 = vrot.lane.b32.xlu0 %v1487, 32
    %v1511 = vpop.permute.xlu0 %1510
    %v1520 = vadd.f32 %v1440, %v1497
    %v1521 = vadd.f32 %v1441, %v1499
    %v1522 = vadd.f32 %v1442, %v1501
    %v1523 = vadd.f32 %v1443, %v1503
    %v1524 = vadd.f32 %v1444, %v1505
    %v1525 = vadd.f32 %v1445, %v1507
    %v1526 = vadd.f32 %v1446, %v1509
    %v1527 = vadd.f32 %v1447, %v1511
    %v1528 = vtanh.pop %v1520
    %v1529 = vtanh.pop %v1521
    %v1530 = vtanh.pop %v1522
    %v1531 = vtanh.pop %v1523
    %v1532 = vtanh.pop %v1524
    %v1533 = vtanh.pop %v1525
    %v1534 = vtanh.pop %v1526
    %v1535 = vtanh.pop %v1527
    %1544 = vrot.lane.b32.xlu0 %v1528, 32
    %v1545 = vpop.permute.xlu0 %1544
    %1546 = vrot.lane.b32.xlu0 %v1529, 32
    %v1547 = vpop.permute.xlu0 %1546
    %1548 = vrot.lane.b32.xlu0 %v1530, 32
    %v1549 = vpop.permute.xlu0 %1548
    %1550 = vrot.lane.b32.xlu0 %v1531, 32
    %v1551 = vpop.permute.xlu0 %1550
    %1552 = vrot.lane.b32.xlu0 %v1532, 32
    %v1553 = vpop.permute.xlu0 %1552
    %1554 = vrot.lane.b32.xlu0 %v1533, 32
    %v1555 = vpop.permute.xlu0 %1554
    %1556 = vrot.lane.b32.xlu0 %v1534, 32
    %v1557 = vpop.permute.xlu0 %1556
    %1558 = vrot.lane.b32.xlu0 %v1535, 32
    %v1559 = vpop.permute.xlu0 %1558
    %v1568 = vmul.f32 %v1393, %v1545
    %v1569 = vmul.f32 %v1395, %v1547
    %v1570 = vmul.f32 %v1397, %v1549
    %v1571 = vmul.f32 %v1399, %v1551
    %v1572 = vmul.f32 %v1401, %v1553
    %v1573 = vmul.f32 %v1403, %v1555
    %v1574 = vmul.f32 %v1405, %v1557
    %v1575 = vmul.f32 %v1407, %v1559
    %v1584 = vrot.slane %v1568, 3
    %v1585 = vrot.slane %v1569, 2
    %v1586 = vsel %vm570, %v1585, %v1584
    %v1587 = vrot.slane %v1570, 1
    %v1588 = vsel %vm573, %v1587, %v1586
    %v1589 = vsel %vm576, %v1571, %v1588
    %v1590 = vrot.slane %v1572, 7
    %v1591 = vsel %vm579, %v1590, %v1589
    %v1592 = vrot.slane %v1573, 6
    %v1593 = vsel %vm582, %v1592, %v1591
    %v1594 = vrot.slane %v1574, 5
    %v1595 = vsel %vm585, %v1594, %v1593
    %v1596 = vrot.slane %v1575, 4
    %v1597 = vsel %vm588, %v1596, %v1595
    %1598 = vrot.lane.b32.xlu0 %v1597, 64
    %v1599 = vpop.permute.xlu0 %1598
    %v1600 = vsel %vm239, %v1599, 0
    %1602 = vmatprep.subr.mxu0 0.0
    %1603 = vmatpush1.msra.mxu0 %v233
    %1604 = vmatprep.subr.mxu0 0.0
    %1605 = vmatpush1.msra.mxu0 %v234
    %1606 = vmatprep.subr.mxu0 0.0
    %1607 = vmatpush1.msra.mxu0 %v235
    %1608 = vmatprep.subr.mxu0 0.0
    %1609 = vmatpush1.msra.mxu0 %v236
    %1610 = vmatprep.subr.mxu0 0.0
    %1611 = vmatpush1.msra.mxu0 0.0
    %1612 = vmatprep.subr.mxu0 0.0
    %1613 = vmatpush1.msra.mxu0 0.0
    %1614 = vmatprep.subr.mxu0 0.0
    %1615 = vmatpush1.msra.mxu0 0.0
    %1616 = vmatprep.subr.mxu0 0.0
    %1617 = vmatpush1.msra.mxu0 0.0
    %1618 = vmatprep.subr.mxu0 0.0
    %1619 = vmatpush1.msra.mxu0 0.0
    %1620 = vmatprep.subr.mxu0 0.0
    %1621 = vmatpush1.msra.mxu0 0.0
    %1622 = vmatprep.subr.mxu0 0.0
    %1623 = vmatpush1.msra.mxu0 0.0
    %1624 = vmatprep.subr.mxu0 0.0
    %1625 = vmatpush1.msra.mxu0 0.0
    %1626 = vmatprep.subr.mxu0 0.0
    %1627 = vmatpush1.msra.mxu0 0.0
    %1628 = vmatprep.subr.mxu0 0.0
    %1629 = vmatpush1.msra.mxu0 0.0
    %1630 = vmatprep.subr.mxu0 0.0
    %1631 = vmatpush1.msra.mxu0 0.0
    %1632 = vmatprep.subr.mxu0 0.0
    %1633 = vmatpush1.msra.mxu0 0.0
    %1634 = vmatprep.subr.mxu0 0.0
    %1635 = vmatpush1.msra.mxu0 0.0
    %1636 = vmatprep.subr.mxu0 0.0
    %1637 = vmatpush1.msra.mxu0 0.0
    %1638 = vmatprep.subr.mxu0 0.0
    %1639 = vmatpush1.msra.mxu0 0.0
    %1640 = vmatprep.subr.mxu0 0.0
    %1641 = vmatpush1.msra.mxu0 0.0
    %1642 = vmatprep.subr.mxu0 0.0
    %1643 = vmatpush1.msra.mxu0 0.0
    %1644 = vmatprep.subr.mxu0 0.0
    %1645 = vmatpush1.msra.mxu0 0.0
    %1646 = vmatprep.subr.mxu0 0.0
    %1647 = vmatpush1.msra.mxu0 0.0
    %1648 = vmatprep.subr.mxu0 0.0
    %1649 = vmatpush1.msra.mxu0 0.0
    %1650 = vmatprep.subr.mxu0 0.0
    %1651 = vmatpush1.msra.mxu0 0.0
    %1652 = vmatprep.subr.mxu0 0.0
    %1653 = vmatpush1.msra.mxu0 0.0
    %1654 = vmatprep.subr.mxu0 0.0
    %1655 = vmatpush1.msra.mxu0 0.0
    %1656 = vmatprep.subr.mxu0 0.0
    %1657 = vmatpush1.msra.mxu0 0.0
    %1658 = vmatprep.subr.mxu0 0.0
    %1659 = vmatpush1.msra.mxu0 0.0
    %1660 = vmatprep.subr.mxu0 0.0
    %1661 = vmatpush1.msra.mxu0 0.0
    %1662 = vmatprep.subr.mxu0 0.0
    %1663 = vmatpush1.msra.mxu0 0.0
    %1664 = vmatprep.subr.mxu0 0.0
    %1665 = vmatpush1.msra.mxu0 0.0
    %1666 = vmatprep.mubr.f32.mxu0 0.0
    %1667 = vmatmul.mubr.f32.gmra.mrb[0].mxu0 %v1600
    %v1668 = vpop.f32.mrb[0].mxu0
    %v1669 = vadd.f32 0.0, %v1668
    %v1670 = vpop.f32.mrb[0].mxu0
    %1671 = vdwg.mxu0
    %v1673 = vrot.slane %v1669, 4
    %v1674 = vrot.slane %v1669, 5
    %v1675 = vrot.slane %v1669, 6
    %v1676 = vrot.slane %v1669, 7
    %v1677 = vrot.slane %v1669, 1
    %v1678 = vrot.slane %v1669, 2
    %v1679 = vrot.slane %v1669, 3
    %v1688 = vadd.f32 %v195, %v1673
    %v1689 = vadd.f32 %v200, %v1674
    %v1690 = vadd.f32 %v205, %v1675
    %v1691 = vadd.f32 %v210, %v1676
    %v1692 = vadd.f32 %v215, %v1669
    %v1693 = vadd.f32 %v220, %v1677
    %v1694 = vadd.f32 %v225, %v1678
    %v1695 = vadd.f32 %v230, %v1679
    %v1696 = vxor.u32 %v1688, 2147483648
    %v1697 = vxor.u32 %v1689, 2147483648
    %v1698 = vxor.u32 %v1690, 2147483648
    %v1699 = vxor.u32 %v1691, 2147483648
    %v1700 = vxor.u32 %v1692, 2147483648
    %v1701 = vxor.u32 %v1693, 2147483648
    %v1702 = vxor.u32 %v1694, 2147483648
    %v1703 = vxor.u32 %v1695, 2147483648
    %v1704 = vmul.f32 %v1696, 1.442695
    %v1705 = vpow.pop %v1704
    %v1706 = vmul.f32 %v1697, 1.442695
    %v1707 = vpow.pop %v1706
    %v1708 = vmul.f32 %v1698, 1.442695
    %v1709 = vpow.pop %v1708
    %v1710 = vmul.f32 %v1699, 1.442695
    %v1711 = vpow.pop %v1710
    %v1712 = vmul.f32 %v1700, 1.442695
    %v1713 = vpow.pop %v1712
    %v1714 = vmul.f32 %v1701, 1.442695
    %v1715 = vpow.pop %v1714
    %v1716 = vmul.f32 %v1702, 1.442695
    %v1717 = vpow.pop %v1716
    %v1718 = vmul.f32 %v1703, 1.442695
    %v1719 = vpow.pop %v1718
    %v1720 = vadd.f32 %v1705, 1.0
    %v1721 = vadd.f32 %v1707, 1.0
    %v1722 = vadd.f32 %v1709, 1.0
    %v1723 = vadd.f32 %v1711, 1.0
    %v1724 = vadd.f32 %v1713, 1.0
    %v1725 = vadd.f32 %v1715, 1.0
    %v1726 = vadd.f32 %v1717, 1.0
    %v1727 = vadd.f32 %v1719, 1.0
    %v1728 = vrcp.pop %v1720
    %v1729 = vmul.f32 1.0, %v1728
    %v1730 = vrcp.pop %v1721
    %v1731 = vmul.f32 1.0, %v1730
    %v1732 = vrcp.pop %v1722
    %v1733 = vmul.f32 1.0, %v1732
    %v1734 = vrcp.pop %v1723
    %v1735 = vmul.f32 1.0, %v1734
    %v1736 = vrcp.pop %v1724
    %v1737 = vmul.f32 1.0, %v1736
    %v1738 = vrcp.pop %v1725
    %v1739 = vmul.f32 1.0, %v1738
    %v1740 = vrcp.pop %v1726
    %v1741 = vmul.f32 1.0, %v1740
    %v1742 = vrcp.pop %v1727
    %v1743 = vmul.f32 1.0, %v1742
    %v1744 = vtanh.pop %v1688
    %v1745 = vtanh.pop %v1689
    %v1746 = vtanh.pop %v1690
    %v1747 = vtanh.pop %v1691
    %v1748 = vtanh.pop %v1692
    %v1749 = vtanh.pop %v1693
    %v1750 = vtanh.pop %v1694
    %v1751 = vtanh.pop %v1695
    %v1760 = vrot.slane %v1520, 7
    %v1761 = vrot.slane %v1521, 7
    %v1762 = vrot.slane %v1522, 7
    %v1763 = vrot.slane %v1523, 7
    %v1764 = vrot.slane %v1524, 7
    %v1765 = vrot.slane %v1525, 7
    %v1766 = vrot.slane %v1526, 7
    %v1767 = vrot.slane %v1527, 7
    %v1776 = vmul.f32 %v1729, %v1760
    %v1777 = vmul.f32 %v1731, %v1761
    %v1778 = vmul.f32 %v1733, %v1762
    %v1779 = vmul.f32 %v1735, %v1763
    %v1780 = vmul.f32 %v1737, %v1764
    %v1781 = vmul.f32 %v1739, %v1765
    %v1782 = vmul.f32 %v1741, %v1766
    %v1783 = vmul.f32 %v1743, %v1767
    %1792 = vrot.lane.b32.xlu0 %v1744, 32
    %v1793 = vpop.permute.xlu0 %1792
    %1794 = vrot.lane.b32.xlu0 %v1745, 32
    %v1795 = vpop.permute.xlu0 %1794
    %1796 = vrot.lane.b32.xlu0 %v1746, 32
    %v1797 = vpop.permute.xlu0 %1796
    %1798 = vrot.lane.b32.xlu0 %v1747, 32
    %v1799 = vpop.permute.xlu0 %1798
    %1800 = vrot.lane.b32.xlu0 %v1748, 32
    %v1801 = vpop.permute.xlu0 %1800
    %1802 = vrot.lane.b32.xlu0 %v1749, 32
    %v1803 = vpop.permute.xlu0 %1802
    %1804 = vrot.lane.b32.xlu0 %v1750, 32
    %v1805 = vpop.permute.xlu0 %1804
    %1806 = vrot.lane.b32.xlu0 %v1751, 32
    %v1807 = vpop.permute.xlu0 %1806
    %v1816 = vmul.f32 %v1729, %v1793
    %v1817 = vmul.f32 %v1731, %v1795
    %v1818 = vmul.f32 %v1733, %v1797
    %v1819 = vmul.f32 %v1735, %v1799
    %v1820 = vmul.f32 %v1737, %v1801
    %v1821 = vmul.f32 %v1739, %v1803
    %v1822 = vmul.f32 %v1741, %v1805
    %v1823 = vmul.f32 %v1743, %v1807
    %1832 = vrot.lane.b32.xlu0 %v1816, 32
    %v1833 = vpop.permute.xlu0 %1832
    %1834 = vrot.lane.b32.xlu0 %v1817, 32
    %v1835 = vpop.permute.xlu0 %1834
    %1836 = vrot.lane.b32.xlu0 %v1818, 32
    %v1837 = vpop.permute.xlu0 %1836
    %1838 = vrot.lane.b32.xlu0 %v1819, 32
    %v1839 = vpop.permute.xlu0 %1838
    %1840 = vrot.lane.b32.xlu0 %v1820, 32
    %v1841 = vpop.permute.xlu0 %1840
    %1842 = vrot.lane.b32.xlu0 %v1821, 32
    %v1843 = vpop.permute.xlu0 %1842
    %1844 = vrot.lane.b32.xlu0 %v1822, 32
    %v1845 = vpop.permute.xlu0 %1844
    %1846 = vrot.lane.b32.xlu0 %v1823, 32
    %v1847 = vpop.permute.xlu0 %1846
    %v1856 = vadd.f32 %v1776, %v1833
    %v1857 = vadd.f32 %v1777, %v1835
    %v1858 = vadd.f32 %v1778, %v1837
    %v1859 = vadd.f32 %v1779, %v1839
    %v1860 = vadd.f32 %v1780, %v1841
    %v1861 = vadd.f32 %v1781, %v1843
    %v1862 = vadd.f32 %v1782, %v1845
    %v1863 = vadd.f32 %v1783, %v1847
    %v1864 = vtanh.pop %v1856
    %v1865 = vtanh.pop %v1857
    %v1866 = vtanh.pop %v1858
    %v1867 = vtanh.pop %v1859
    %v1868 = vtanh.pop %v1860
    %v1869 = vtanh.pop %v1861
    %v1870 = vtanh.pop %v1862
    %v1871 = vtanh.pop %v1863
    %1880 = vrot.lane.b32.xlu0 %v1864, 32
    %v1881 = vpop.permute.xlu0 %1880
    %1882 = vrot.lane.b32.xlu0 %v1865, 32
    %v1883 = vpop.permute.xlu0 %1882
    %1884 = vrot.lane.b32.xlu0 %v1866, 32
    %v1885 = vpop.permute.xlu0 %1884
    %1886 = vrot.lane.b32.xlu0 %v1867, 32
    %v1887 = vpop.permute.xlu0 %1886
    %1888 = vrot.lane.b32.xlu0 %v1868, 32
    %v1889 = vpop.permute.xlu0 %1888
    %1890 = vrot.lane.b32.xlu0 %v1869, 32
    %v1891 = vpop.permute.xlu0 %1890
    %1892 = vrot.lane.b32.xlu0 %v1870, 32
    %v1893 = vpop.permute.xlu0 %1892
    %1894 = vrot.lane.b32.xlu0 %v1871, 32
    %v1895 = vpop.permute.xlu0 %1894
    %v1904 = vmul.f32 %v1729, %v1881
    %v1905 = vmul.f32 %v1731, %v1883
    %v1906 = vmul.f32 %v1733, %v1885
    %v1907 = vmul.f32 %v1735, %v1887
    %v1908 = vmul.f32 %v1737, %v1889
    %v1909 = vmul.f32 %v1739, %v1891
    %v1910 = vmul.f32 %v1741, %v1893
    %v1911 = vmul.f32 %v1743, %v1895
    %v1920 = vrot.slane %v1904, 4
    %v1921 = vrot.slane %v1905, 3
    %v1922 = vsel %vm570, %v1921, %v1920
    %v1923 = vrot.slane %v1906, 2
    %v1924 = vsel %vm573, %v1923, %v1922
    %v1925 = vrot.slane %v1907, 1
    %v1926 = vsel %vm576, %v1925, %v1924
    %v1927 = vsel %vm579, %v1908, %v1926
    %v1928 = vrot.slane %v1909, 7
    %v1929 = vsel %vm582, %v1928, %v1927
    %v1930 = vrot.slane %v1910, 6
    %v1931 = vsel %vm585, %v1930, %v1929
    %v1932 = vrot.slane %v1911, 5
    %v1933 = vsel %vm588, %v1932, %v1931
    %1934 = vrot.lane.b32.xlu0 %v1933, 64
    %v1935 = vpop.permute.xlu0 %1934
    %v1936 = vsel %vm239, %v1935, 0
    %1938 = vmatprep.subr.mxu0 0.0
    %1939 = vmatpush1.msra.mxu0 %v233
    %1940 = vmatprep.subr.mxu0 0.0
    %1941 = vmatpush1.msra.mxu0 %v234
    %1942 = vmatprep.subr.mxu0 0.0
    %1943 = vmatpush1.msra.mxu0 %v235
    %1944 = vmatprep.subr.mxu0 0.0
    %1945 = vmatpush1.msra.mxu0 %v236
    %1946 = vmatprep.subr.mxu0 0.0
    %1947 = vmatpush1.msra.mxu0 0.0
    %1948 = vmatprep.subr.mxu0 0.0
    %1949 = vmatpush1.msra.mxu0 0.0
    %1950 = vmatprep.subr.mxu0 0.0
    %1951 = vmatpush1.msra.mxu0 0.0
    %1952 = vmatprep.subr.mxu0 0.0
    %1953 = vmatpush1.msra.mxu0 0.0
    %1954 = vmatprep.subr.mxu0 0.0
    %1955 = vmatpush1.msra.mxu0 0.0
    %1956 = vmatprep.subr.mxu0 0.0
    %1957 = vmatpush1.msra.mxu0 0.0
    %1958 = vmatprep.subr.mxu0 0.0
    %1959 = vmatpush1.msra.mxu0 0.0
    %1960 = vmatprep.subr.mxu0 0.0
    %1961 = vmatpush1.msra.mxu0 0.0
    %1962 = vmatprep.subr.mxu0 0.0
    %1963 = vmatpush1.msra.mxu0 0.0
    %1964 = vmatprep.subr.mxu0 0.0
    %1965 = vmatpush1.msra.mxu0 0.0
    %1966 = vmatprep.subr.mxu0 0.0
    %1967 = vmatpush1.msra.mxu0 0.0
    %1968 = vmatprep.subr.mxu0 0.0
    %1969 = vmatpush1.msra.mxu0 0.0
    %1970 = vmatprep.subr.mxu0 0.0
    %1971 = vmatpush1.msra.mxu0 0.0
    %1972 = vmatprep.subr.mxu0 0.0
    %1973 = vmatpush1.msra.mxu0 0.0
    %1974 = vmatprep.subr.mxu0 0.0
    %1975 = vmatpush1.msra.mxu0 0.0
    %1976 = vmatprep.subr.mxu0 0.0
    %1977 = vmatpush1.msra.mxu0 0.0
    %1978 = vmatprep.subr.mxu0 0.0
    %1979 = vmatpush1.msra.mxu0 0.0
    %1980 = vmatprep.subr.mxu0 0.0
    %1981 = vmatpush1.msra.mxu0 0.0
    %1982 = vmatprep.subr.mxu0 0.0
    %1983 = vmatpush1.msra.mxu0 0.0
    %1984 = vmatprep.subr.mxu0 0.0
    %1985 = vmatpush1.msra.mxu0 0.0
    %1986 = vmatprep.subr.mxu0 0.0
    %1987 = vmatpush1.msra.mxu0 0.0
    %1988 = vmatprep.subr.mxu0 0.0
    %1989 = vmatpush1.msra.mxu0 0.0
    %1990 = vmatprep.subr.mxu0 0.0
    %1991 = vmatpush1.msra.mxu0 0.0
    %1992 = vmatprep.subr.mxu0 0.0
    %1993 = vmatpush1.msra.mxu0 0.0
    %1994 = vmatprep.subr.mxu0 0.0
    %1995 = vmatpush1.msra.mxu0 0.0
    %1996 = vmatprep.subr.mxu0 0.0
    %1997 = vmatpush1.msra.mxu0 0.0
    %1998 = vmatprep.subr.mxu0 0.0
    %1999 = vmatpush1.msra.mxu0 0.0
    %2000 = vmatprep.subr.mxu0 0.0
    %2001 = vmatpush1.msra.mxu0 0.0
    %2002 = vmatprep.mubr.f32.mxu0 0.0
    %2003 = vmatmul.mubr.f32.gmra.mrb[0].mxu0 %v1936
    %v2004 = vpop.f32.mrb[0].mxu0
    %v2005 = vadd.f32 0.0, %v2004
    %v2006 = vpop.f32.mrb[0].mxu0
    %2007 = vdwg.mxu0
    %v2009 = vrot.slane %v2005, 3
    %v2010 = vrot.slane %v2005, 4
    %v2011 = vrot.slane %v2005, 5
    %v2012 = vrot.slane %v2005, 6
    %v2013 = vrot.slane %v2005, 7
    %v2014 = vrot.slane %v2005, 1
    %v2015 = vrot.slane %v2005, 2
    %v2024 = vadd.f32 %v195, %v2009
    %v2025 = vadd.f32 %v200, %v2010
    %v2026 = vadd.f32 %v205, %v2011
    %v2027 = vadd.f32 %v210, %v2012
    %v2028 = vadd.f32 %v215, %v2013
    %v2029 = vadd.f32 %v220, %v2005
    %v2030 = vadd.f32 %v225, %v2014
    %v2031 = vadd.f32 %v230, %v2015
    %v2032 = vxor.u32 %v2024, 2147483648
    %v2033 = vxor.u32 %v2025, 2147483648
    %v2034 = vxor.u32 %v2026, 2147483648
    %v2035 = vxor.u32 %v2027, 2147483648
    %v2036 = vxor.u32 %v2028, 2147483648
    %v2037 = vxor.u32 %v2029, 2147483648
    %v2038 = vxor.u32 %v2030, 2147483648
    %v2039 = vxor.u32 %v2031, 2147483648
    %v2040 = vmul.f32 %v2032, 1.442695
    %v2041 = vpow.pop %v2040
    %v2042 = vmul.f32 %v2033, 1.442695
    %v2043 = vpow.pop %v2042
    %v2044 = vmul.f32 %v2034, 1.442695
    %v2045 = vpow.pop %v2044
    %v2046 = vmul.f32 %v2035, 1.442695
    %v2047 = vpow.pop %v2046
    %v2048 = vmul.f32 %v2036, 1.442695
    %v2049 = vpow.pop %v2048
    %v2050 = vmul.f32 %v2037, 1.442695
    %v2051 = vpow.pop %v2050
    %v2052 = vmul.f32 %v2038, 1.442695
    %v2053 = vpow.pop %v2052
    %v2054 = vmul.f32 %v2039, 1.442695
    %v2055 = vpow.pop %v2054
    %v2056 = vadd.f32 %v2041, 1.0
    %v2057 = vadd.f32 %v2043, 1.0
    %v2058 = vadd.f32 %v2045, 1.0
    %v2059 = vadd.f32 %v2047, 1.0
    %v2060 = vadd.f32 %v2049, 1.0
    %v2061 = vadd.f32 %v2051, 1.0
    %v2062 = vadd.f32 %v2053, 1.0
    %v2063 = vadd.f32 %v2055, 1.0
    %v2064 = vrcp.pop %v2056
    %v2065 = vmul.f32 1.0, %v2064
    %v2066 = vrcp.pop %v2057
    %v2067 = vmul.f32 1.0, %v2066
    %v2068 = vrcp.pop %v2058
    %v2069 = vmul.f32 1.0, %v2068
    %v2070 = vrcp.pop %v2059
    %v2071 = vmul.f32 1.0, %v2070
    %v2072 = vrcp.pop %v2060
    %v2073 = vmul.f32 1.0, %v2072
    %v2074 = vrcp.pop %v2061
    %v2075 = vmul.f32 1.0, %v2074
    %v2076 = vrcp.pop %v2062
    %v2077 = vmul.f32 1.0, %v2076
    %v2078 = vrcp.pop %v2063
    %v2079 = vmul.f32 1.0, %v2078
    %v2080 = vtanh.pop %v2024
    %v2081 = vtanh.pop %v2025
    %v2082 = vtanh.pop %v2026
    %v2083 = vtanh.pop %v2027
    %v2084 = vtanh.pop %v2028
    %v2085 = vtanh.pop %v2029
    %v2086 = vtanh.pop %v2030
    %v2087 = vtanh.pop %v2031
    %v2096 = vrot.slane %v1856, 7
    %v2097 = vrot.slane %v1857, 7
    %v2098 = vrot.slane %v1858, 7
    %v2099 = vrot.slane %v1859, 7
    %v2100 = vrot.slane %v1860, 7
    %v2101 = vrot.slane %v1861, 7
    %v2102 = vrot.slane %v1862, 7
    %v2103 = vrot.slane %v1863, 7
    %v2112 = vmul.f32 %v2065, %v2096
    %v2113 = vmul.f32 %v2067, %v2097
    %v2114 = vmul.f32 %v2069, %v2098
    %v2115 = vmul.f32 %v2071, %v2099
    %v2116 = vmul.f32 %v2073, %v2100
    %v2117 = vmul.f32 %v2075, %v2101
    %v2118 = vmul.f32 %v2077, %v2102
    %v2119 = vmul.f32 %v2079, %v2103
    %2128 = vrot.lane.b32.xlu0 %v2080, 32
    %v2129 = vpop.permute.xlu0 %2128
    %2130 = vrot.lane.b32.xlu0 %v2081, 32
    %v2131 = vpop.permute.xlu0 %2130
    %2132 = vrot.lane.b32.xlu0 %v2082, 32
    %v2133 = vpop.permute.xlu0 %2132
    %2134 = vrot.lane.b32.xlu0 %v2083, 32
    %v2135 = vpop.permute.xlu0 %2134
    %2136 = vrot.lane.b32.xlu0 %v2084, 32
    %v2137 = vpop.permute.xlu0 %2136
    %2138 = vrot.lane.b32.xlu0 %v2085, 32
    %v2139 = vpop.permute.xlu0 %2138
    %2140 = vrot.lane.b32.xlu0 %v2086, 32
    %v2141 = vpop.permute.xlu0 %2140
    %2142 = vrot.lane.b32.xlu0 %v2087, 32
    %v2143 = vpop.permute.xlu0 %2142
    %v2152 = vmul.f32 %v2065, %v2129
    %v2153 = vmul.f32 %v2067, %v2131
    %v2154 = vmul.f32 %v2069, %v2133
    %v2155 = vmul.f32 %v2071, %v2135
    %v2156 = vmul.f32 %v2073, %v2137
    %v2157 = vmul.f32 %v2075, %v2139
    %v2158 = vmul.f32 %v2077, %v2141
    %v2159 = vmul.f32 %v2079, %v2143
    %2168 = vrot.lane.b32.xlu0 %v2152, 32
    %v2169 = vpop.permute.xlu0 %2168
    %2170 = vrot.lane.b32.xlu0 %v2153, 32
    %v2171 = vpop.permute.xlu0 %2170
    %2172 = vrot.lane.b32.xlu0 %v2154, 32
    %v2173 = vpop.permute.xlu0 %2172
    %2174 = vrot.lane.b32.xlu0 %v2155, 32
    %v2175 = vpop.permute.xlu0 %2174
    %2176 = vrot.lane.b32.xlu0 %v2156, 32
    %v2177 = vpop.permute.xlu0 %2176
    %2178 = vrot.lane.b32.xlu0 %v2157, 32
    %v2179 = vpop.permute.xlu0 %2178
    %2180 = vrot.lane.b32.xlu0 %v2158, 32
    %v2181 = vpop.permute.xlu0 %2180
    %2182 = vrot.lane.b32.xlu0 %v2159, 32
    %v2183 = vpop.permute.xlu0 %2182
    %v2192 = vadd.f32 %v2112, %v2169
    %v2193 = vadd.f32 %v2113, %v2171
    %v2194 = vadd.f32 %v2114, %v2173
    %v2195 = vadd.f32 %v2115, %v2175
    %v2196 = vadd.f32 %v2116, %v2177
    %v2197 = vadd.f32 %v2117, %v2179
    %v2198 = vadd.f32 %v2118, %v2181
    %v2199 = vadd.f32 %v2119, %v2183
    %v2200 = vtanh.pop %v2192
    %v2201 = vtanh.pop %v2193
    %v2202 = vtanh.pop %v2194
    %v2203 = vtanh.pop %v2195
    %v2204 = vtanh.pop %v2196
    %v2205 = vtanh.pop %v2197
    %v2206 = vtanh.pop %v2198
    %v2207 = vtanh.pop %v2199
    %2216 = vrot.lane.b32.xlu0 %v2200, 32
    %v2217 = vpop.permute.xlu0 %2216
    %2218 = vrot.lane.b32.xlu0 %v2201, 32
    %v2219 = vpop.permute.xlu0 %2218
    %2220 = vrot.lane.b32.xlu0 %v2202, 32
    %v2221 = vpop.permute.xlu0 %2220
    %2222 = vrot.lane.b32.xlu0 %v2203, 32
    %v2223 = vpop.permute.xlu0 %2222
    %2224 = vrot.lane.b32.xlu0 %v2204, 32
    %v2225 = vpop.permute.xlu0 %2224
    %2226 = vrot.lane.b32.xlu0 %v2205, 32
    %v2227 = vpop.permute.xlu0 %2226
    %2228 = vrot.lane.b32.xlu0 %v2206, 32
    %v2229 = vpop.permute.xlu0 %2228
    %2230 = vrot.lane.b32.xlu0 %v2207, 32
    %v2231 = vpop.permute.xlu0 %2230
    %v2240 = vmul.f32 %v2065, %v2217
    %v2241 = vmul.f32 %v2067, %v2219
    %v2242 = vmul.f32 %v2069, %v2221
    %v2243 = vmul.f32 %v2071, %v2223
    %v2244 = vmul.f32 %v2073, %v2225
    %v2245 = vmul.f32 %v2075, %v2227
    %v2246 = vmul.f32 %v2077, %v2229
    %v2247 = vmul.f32 %v2079, %v2231
    %v2256 = vrot.slane %v2240, 5
    %v2257 = vrot.slane %v2241, 4
    %v2258 = vsel %vm570, %v2257, %v2256
    %v2259 = vrot.slane %v2242, 3
    %v2260 = vsel %vm573, %v2259, %v2258
    %v2261 = vrot.slane %v2243, 2
    %v2262 = vsel %vm576, %v2261, %v2260
    %v2263 = vrot.slane %v2244, 1
    %v2264 = vsel %vm579, %v2263, %v2262
    %v2265 = vsel %vm582, %v2245, %v2264
    %v2266 = vrot.slane %v2246, 7
    %v2267 = vsel %vm585, %v2266, %v2265
    %v2268 = vrot.slane %v2247, 6
    %v2269 = vsel %vm588, %v2268, %v2267
    %2270 = vrot.lane.b32.xlu0 %v2269, 64
    %v2271 = vpop.permute.xlu0 %2270
    %v2272 = vsel %vm239, %v2271, 0
    %2274 = vmatprep.subr.mxu0 0.0
    %2275 = vmatpush1.msra.mxu0 %v233
    %2276 = vmatprep.subr.mxu0 0.0
    %2277 = vmatpush1.msra.mxu0 %v234
    %2278 = vmatprep.subr.mxu0 0.0
    %2279 = vmatpush1.msra.mxu0 %v235
    %2280 = vmatprep.subr.mxu0 0.0
    %2281 = vmatpush1.msra.mxu0 %v236
    %2282 = vmatprep.subr.mxu0 0.0
    %2283 = vmatpush1.msra.mxu0 0.0
    %2284 = vmatprep.subr.mxu0 0.0
    %2285 = vmatpush1.msra.mxu0 0.0
    %2286 = vmatprep.subr.mxu0 0.0
    %2287 = vmatpush1.msra.mxu0 0.0
    %2288 = vmatprep.subr.mxu0 0.0
    %2289 = vmatpush1.msra.mxu0 0.0
    %2290 = vmatprep.subr.mxu0 0.0
    %2291 = vmatpush1.msra.mxu0 0.0
    %2292 = vmatprep.subr.mxu0 0.0
    %2293 = vmatpush1.msra.mxu0 0.0
    %2294 = vmatprep.subr.mxu0 0.0
    %2295 = vmatpush1.msra.mxu0 0.0
    %2296 = vmatprep.subr.mxu0 0.0
    %2297 = vmatpush1.msra.mxu0 0.0
    %2298 = vmatprep.subr.mxu0 0.0
    %2299 = vmatpush1.msra.mxu0 0.0
    %2300 = vmatprep.subr.mxu0 0.0
    %2301 = vmatpush1.msra.mxu0 0.0
    %2302 = vmatprep.subr.mxu0 0.0
    %2303 = vmatpush1.msra.mxu0 0.0
    %2304 = vmatprep.subr.mxu0 0.0
    %2305 = vmatpush1.msra.mxu0 0.0
    %2306 = vmatprep.subr.mxu0 0.0
    %2307 = vmatpush1.msra.mxu0 0.0
    %2308 = vmatprep.subr.mxu0 0.0
    %2309 = vmatpush1.msra.mxu0 0.0
    %2310 = vmatprep.subr.mxu0 0.0
    %2311 = vmatpush1.msra.mxu0 0.0
    %2312 = vmatprep.subr.mxu0 0.0
    %2313 = vmatpush1.msra.mxu0 0.0
    %2314 = vmatprep.subr.mxu0 0.0
    %2315 = vmatpush1.msra.mxu0 0.0
    %2316 = vmatprep.subr.mxu0 0.0
    %2317 = vmatpush1.msra.mxu0 0.0
    %2318 = vmatprep.subr.mxu0 0.0
    %2319 = vmatpush1.msra.mxu0 0.0
    %2320 = vmatprep.subr.mxu0 0.0
    %2321 = vmatpush1.msra.mxu0 0.0
    %2322 = vmatprep.subr.mxu0 0.0
    %2323 = vmatpush1.msra.mxu0 0.0
    %2324 = vmatprep.subr.mxu0 0.0
    %2325 = vmatpush1.msra.mxu0 0.0
    %2326 = vmatprep.subr.mxu0 0.0
    %2327 = vmatpush1.msra.mxu0 0.0
    %2328 = vmatprep.subr.mxu0 0.0
    %2329 = vmatpush1.msra.mxu0 0.0
    %2330 = vmatprep.subr.mxu0 0.0
    %2331 = vmatpush1.msra.mxu0 0.0
    %2332 = vmatprep.subr.mxu0 0.0
    %2333 = vmatpush1.msra.mxu0 0.0
    %2334 = vmatprep.subr.mxu0 0.0
    %2335 = vmatpush1.msra.mxu0 0.0
    %2336 = vmatprep.subr.mxu0 0.0
    %2337 = vmatpush1.msra.mxu0 0.0
    %2338 = vmatprep.mubr.f32.mxu0 0.0
    %2339 = vmatmul.mubr.f32.gmra.mrb[0].mxu0 %v2272
    %v2340 = vpop.f32.mrb[0].mxu0
    %v2341 = vadd.f32 0.0, %v2340
    %v2342 = vpop.f32.mrb[0].mxu0
    %2343 = vdwg.mxu0
    %v2345 = vrot.slane %v2341, 2
    %v2346 = vrot.slane %v2341, 3
    %v2347 = vrot.slane %v2341, 4
    %v2348 = vrot.slane %v2341, 5
    %v2349 = vrot.slane %v2341, 6
    %v2350 = vrot.slane %v2341, 7
    %v2351 = vrot.slane %v2341, 1
    %v2360 = vadd.f32 %v195, %v2345
    %v2361 = vadd.f32 %v200, %v2346
    %v2362 = vadd.f32 %v205, %v2347
    %v2363 = vadd.f32 %v210, %v2348
    %v2364 = vadd.f32 %v215, %v2349
    %v2365 = vadd.f32 %v220, %v2350
    %v2366 = vadd.f32 %v225, %v2341
    %v2367 = vadd.f32 %v230, %v2351
    %v2368 = vxor.u32 %v2360, 2147483648
    %v2369 = vxor.u32 %v2361, 2147483648
    %v2370 = vxor.u32 %v2362, 2147483648
    %v2371 = vxor.u32 %v2363, 2147483648
    %v2372 = vxor.u32 %v2364, 2147483648
    %v2373 = vxor.u32 %v2365, 2147483648
    %v2374 = vxor.u32 %v2366, 2147483648
    %v2375 = vxor.u32 %v2367, 2147483648
    %v2376 = vmul.f32 %v2368, 1.442695
    %v2377 = vpow.pop %v2376
    %v2378 = vmul.f32 %v2369, 1.442695
    %v2379 = vpow.pop %v2378
    %v2380 = vmul.f32 %v2370, 1.442695
    %v2381 = vpow.pop %v2380
    %v2382 = vmul.f32 %v2371, 1.442695
    %v2383 = vpow.pop %v2382
    %v2384 = vmul.f32 %v2372, 1.442695
    %v2385 = vpow.pop %v2384
    %v2386 = vmul.f32 %v2373, 1.442695
    %v2387 = vpow.pop %v2386
    %v2388 = vmul.f32 %v2374, 1.442695
    %v2389 = vpow.pop %v2388
    %v2390 = vmul.f32 %v2375, 1.442695
    %v2391 = vpow.pop %v2390
    %v2392 = vadd.f32 %v2377, 1.0
    %v2393 = vadd.f32 %v2379, 1.0
    %v2394 = vadd.f32 %v2381, 1.0
    %v2395 = vadd.f32 %v2383, 1.0
    %v2396 = vadd.f32 %v2385, 1.0
    %v2397 = vadd.f32 %v2387, 1.0
    %v2398 = vadd.f32 %v2389, 1.0
    %v2399 = vadd.f32 %v2391, 1.0
    %v2400 = vrcp.pop %v2392
    %v2401 = vmul.f32 1.0, %v2400
    %v2402 = vrcp.pop %v2393
    %v2403 = vmul.f32 1.0, %v2402
    %v2404 = vrcp.pop %v2394
    %v2405 = vmul.f32 1.0, %v2404
    %v2406 = vrcp.pop %v2395
    %v2407 = vmul.f32 1.0, %v2406
    %v2408 = vrcp.pop %v2396
    %v2409 = vmul.f32 1.0, %v2408
    %v2410 = vrcp.pop %v2397
    %v2411 = vmul.f32 1.0, %v2410
    %v2412 = vrcp.pop %v2398
    %v2413 = vmul.f32 1.0, %v2412
    %v2414 = vrcp.pop %v2399
    %v2415 = vmul.f32 1.0, %v2414
    %v2416 = vtanh.pop %v2360
    %v2417 = vtanh.pop %v2361
    %v2418 = vtanh.pop %v2362
    %v2419 = vtanh.pop %v2363
    %v2420 = vtanh.pop %v2364
    %v2421 = vtanh.pop %v2365
    %v2422 = vtanh.pop %v2366
    %v2423 = vtanh.pop %v2367
    %v2432 = vrot.slane %v2192, 7
    %v2433 = vrot.slane %v2193, 7
    %v2434 = vrot.slane %v2194, 7
    %v2435 = vrot.slane %v2195, 7
    %v2436 = vrot.slane %v2196, 7
    %v2437 = vrot.slane %v2197, 7
    %v2438 = vrot.slane %v2198, 7
    %v2439 = vrot.slane %v2199, 7
    %v2448 = vmul.f32 %v2401, %v2432
    %v2449 = vmul.f32 %v2403, %v2433
    %v2450 = vmul.f32 %v2405, %v2434
    %v2451 = vmul.f32 %v2407, %v2435
    %v2452 = vmul.f32 %v2409, %v2436
    %v2453 = vmul.f32 %v2411, %v2437
    %v2454 = vmul.f32 %v2413, %v2438
    %v2455 = vmul.f32 %v2415, %v2439
    %2464 = vrot.lane.b32.xlu0 %v2416, 32
    %v2465 = vpop.permute.xlu0 %2464
    %2466 = vrot.lane.b32.xlu0 %v2417, 32
    %v2467 = vpop.permute.xlu0 %2466
    %2468 = vrot.lane.b32.xlu0 %v2418, 32
    %v2469 = vpop.permute.xlu0 %2468
    %2470 = vrot.lane.b32.xlu0 %v2419, 32
    %v2471 = vpop.permute.xlu0 %2470
    %2472 = vrot.lane.b32.xlu0 %v2420, 32
    %v2473 = vpop.permute.xlu0 %2472
    %2474 = vrot.lane.b32.xlu0 %v2421, 32
    %v2475 = vpop.permute.xlu0 %2474
    %2476 = vrot.lane.b32.xlu0 %v2422, 32
    %v2477 = vpop.permute.xlu0 %2476
    %2478 = vrot.lane.b32.xlu0 %v2423, 32
    %v2479 = vpop.permute.xlu0 %2478
    %v2488 = vmul.f32 %v2401, %v2465
    %v2489 = vmul.f32 %v2403, %v2467
    %v2490 = vmul.f32 %v2405, %v2469
    %v2491 = vmul.f32 %v2407, %v2471
    %v2492 = vmul.f32 %v2409, %v2473
    %v2493 = vmul.f32 %v2411, %v2475
    %v2494 = vmul.f32 %v2413, %v2477
    %v2495 = vmul.f32 %v2415, %v2479
    %2504 = vrot.lane.b32.xlu0 %v2488, 32
    %v2505 = vpop.permute.xlu0 %2504
    %2506 = vrot.lane.b32.xlu0 %v2489, 32
    %v2507 = vpop.permute.xlu0 %2506
    %2508 = vrot.lane.b32.xlu0 %v2490, 32
    %v2509 = vpop.permute.xlu0 %2508
    %2510 = vrot.lane.b32.xlu0 %v2491, 32
    %v2511 = vpop.permute.xlu0 %2510
    %2512 = vrot.lane.b32.xlu0 %v2492, 32
    %v2513 = vpop.permute.xlu0 %2512
    %2514 = vrot.lane.b32.xlu0 %v2493, 32
    %v2515 = vpop.permute.xlu0 %2514
    %2516 = vrot.lane.b32.xlu0 %v2494, 32
    %v2517 = vpop.permute.xlu0 %2516
    %2518 = vrot.lane.b32.xlu0 %v2495, 32
    %v2519 = vpop.permute.xlu0 %2518
    %v2528 = vadd.f32 %v2448, %v2505
    %v2529 = vadd.f32 %v2449, %v2507
    %v2530 = vadd.f32 %v2450, %v2509
    %v2531 = vadd.f32 %v2451, %v2511
    %v2532 = vadd.f32 %v2452, %v2513
    %v2533 = vadd.f32 %v2453, %v2515
    %v2534 = vadd.f32 %v2454, %v2517
    %v2535 = vadd.f32 %v2455, %v2519
    %v2536 = vtanh.pop %v2528
    %v2537 = vtanh.pop %v2529
    %v2538 = vtanh.pop %v2530
    %v2539 = vtanh.pop %v2531
    %v2540 = vtanh.pop %v2532
    %v2541 = vtanh.pop %v2533
    %v2542 = vtanh.pop %v2534
    %v2543 = vtanh.pop %v2535
    %2552 = vrot.lane.b32.xlu0 %v2536, 32
    %v2553 = vpop.permute.xlu0 %2552
    %2554 = vrot.lane.b32.xlu0 %v2537, 32
    %v2555 = vpop.permute.xlu0 %2554
    %2556 = vrot.lane.b32.xlu0 %v2538, 32
    %v2557 = vpop.permute.xlu0 %2556
    %2558 = vrot.lane.b32.xlu0 %v2539, 32
    %v2559 = vpop.permute.xlu0 %2558
    %2560 = vrot.lane.b32.xlu0 %v2540, 32
    %v2561 = vpop.permute.xlu0 %2560
    %2562 = vrot.lane.b32.xlu0 %v2541, 32
    %v2563 = vpop.permute.xlu0 %2562
    %2564 = vrot.lane.b32.xlu0 %v2542, 32
    %v2565 = vpop.permute.xlu0 %2564
    %2566 = vrot.lane.b32.xlu0 %v2543, 32
    %v2567 = vpop.permute.xlu0 %2566
    %v2576 = vmul.f32 %v2401, %v2553
    %v2577 = vmul.f32 %v2403, %v2555
    %v2578 = vmul.f32 %v2405, %v2557
    %v2579 = vmul.f32 %v2407, %v2559
    %v2580 = vmul.f32 %v2409, %v2561
    %v2581 = vmul.f32 %v2411, %v2563
    %v2582 = vmul.f32 %v2413, %v2565
    %v2583 = vmul.f32 %v2415, %v2567
    %v2592 = vrot.slane %v2576, 6
    %v2593 = vrot.slane %v2577, 5
    %v2594 = vsel %vm570, %v2593, %v2592
    %v2595 = vrot.slane %v2578, 4
    %v2596 = vsel %vm573, %v2595, %v2594
    %v2597 = vrot.slane %v2579, 3
    %v2598 = vsel %vm576, %v2597, %v2596
    %v2599 = vrot.slane %v2580, 2
    %v2600 = vsel %vm579, %v2599, %v2598
    %v2601 = vrot.slane %v2581, 1
    %v2602 = vsel %vm582, %v2601, %v2600
    %v2603 = vsel %vm585, %v2582, %v2602
    %v2604 = vrot.slane %v2583, 7
    %v2605 = vsel %vm588, %v2604, %v2603
    %2606 = vrot.lane.b32.xlu0 %v2605, 64
    %v2607 = vpop.permute.xlu0 %2606
    %v2608 = vsel %vm239, %v2607, 0
    %2610 = vmatprep.subr.mxu0 0.0
    %2611 = vmatpush1.msra.mxu0 %v233
    %2612 = vmatprep.subr.mxu0 0.0
    %2613 = vmatpush1.msra.mxu0 %v234
    %2614 = vmatprep.subr.mxu0 0.0
    %2615 = vmatpush1.msra.mxu0 %v235
    %2616 = vmatprep.subr.mxu0 0.0
    %2617 = vmatpush1.msra.mxu0 %v236
    %2618 = vmatprep.subr.mxu0 0.0
    %2619 = vmatpush1.msra.mxu0 0.0
    %2620 = vmatprep.subr.mxu0 0.0
    %2621 = vmatpush1.msra.mxu0 0.0
    %2622 = vmatprep.subr.mxu0 0.0
    %2623 = vmatpush1.msra.mxu0 0.0
    %2624 = vmatprep.subr.mxu0 0.0
    %2625 = vmatpush1.msra.mxu0 0.0
    %2626 = vmatprep.subr.mxu0 0.0
    %2627 = vmatpush1.msra.mxu0 0.0
    %2628 = vmatprep.subr.mxu0 0.0
    %2629 = vmatpush1.msra.mxu0 0.0
    %2630 = vmatprep.subr.mxu0 0.0
    %2631 = vmatpush1.msra.mxu0 0.0
    %2632 = vmatprep.subr.mxu0 0.0
    %2633 = vmatpush1.msra.mxu0 0.0
    %2634 = vmatprep.subr.mxu0 0.0
    %2635 = vmatpush1.msra.mxu0 0.0
    %2636 = vmatprep.subr.mxu0 0.0
    %2637 = vmatpush1.msra.mxu0 0.0
    %2638 = vmatprep.subr.mxu0 0.0
    %2639 = vmatpush1.msra.mxu0 0.0
    %2640 = vmatprep.subr.mxu0 0.0
    %2641 = vmatpush1.msra.mxu0 0.0
    %2642 = vmatprep.subr.mxu0 0.0
    %2643 = vmatpush1.msra.mxu0 0.0
    %2644 = vmatprep.subr.mxu0 0.0
    %2645 = vmatpush1.msra.mxu0 0.0
    %2646 = vmatprep.subr.mxu0 0.0
    %2647 = vmatpush1.msra.mxu0 0.0
    %2648 = vmatprep.subr.mxu0 0.0
    %2649 = vmatpush1.msra.mxu0 0.0
    %2650 = vmatprep.subr.mxu0 0.0
    %2651 = vmatpush1.msra.mxu0 0.0
    %2652 = vmatprep.subr.mxu0 0.0
    %2653 = vmatpush1.msra.mxu0 0.0
    %2654 = vmatprep.subr.mxu0 0.0
    %2655 = vmatpush1.msra.mxu0 0.0
    %2656 = vmatprep.subr.mxu0 0.0
    %2657 = vmatpush1.msra.mxu0 0.0
    %2658 = vmatprep.subr.mxu0 0.0
    %2659 = vmatpush1.msra.mxu0 0.0
    %2660 = vmatprep.subr.mxu0 0.0
    %2661 = vmatpush1.msra.mxu0 0.0
    %2662 = vmatprep.subr.mxu0 0.0
    %2663 = vmatpush1.msra.mxu0 0.0
    %2664 = vmatprep.subr.mxu0 0.0
    %2665 = vmatpush1.msra.mxu0 0.0
    %2666 = vmatprep.subr.mxu0 0.0
    %2667 = vmatpush1.msra.mxu0 0.0
    %2668 = vmatprep.subr.mxu0 0.0
    %2669 = vmatpush1.msra.mxu0 0.0
    %2670 = vmatprep.subr.mxu0 0.0
    %2671 = vmatpush1.msra.mxu0 0.0
    %2672 = vmatprep.subr.mxu0 0.0
    %2673 = vmatpush1.msra.mxu0 0.0
    %2674 = vmatprep.mubr.f32.mxu0 0.0
    %2675 = vmatmul.mubr.f32.gmra.mrb[0].mxu0 %v2608
    %v2676 = vpop.f32.mrb[0].mxu0
    %v2677 = vadd.f32 0.0, %v2676
    %v2678 = vpop.f32.mrb[0].mxu0
    %2679 = vdwg.mxu0
    %v2681 = vrot.slane %v2677, 1
    %v2682 = vrot.slane %v2677, 2
    %v2683 = vrot.slane %v2677, 3
    %v2684 = vrot.slane %v2677, 4
    %v2685 = vrot.slane %v2677, 5
    %v2686 = vrot.slane %v2677, 6
    %v2687 = vrot.slane %v2677, 7
    %v2696 = vadd.f32 %v195, %v2681
    %v2697 = vadd.f32 %v200, %v2682
    %v2698 = vadd.f32 %v205, %v2683
    %v2699 = vadd.f32 %v210, %v2684
    %v2700 = vadd.f32 %v215, %v2685
    %v2701 = vadd.f32 %v220, %v2686
    %v2702 = vadd.f32 %v225, %v2687
    %v2703 = vadd.f32 %v230, %v2677
    %v2704 = vxor.u32 %v2696, 2147483648
    %v2705 = vxor.u32 %v2697, 2147483648
    %v2706 = vxor.u32 %v2698, 2147483648
    %v2707 = vxor.u32 %v2699, 2147483648
    %v2708 = vxor.u32 %v2700, 2147483648
    %v2709 = vxor.u32 %v2701, 2147483648
    %v2710 = vxor.u32 %v2702, 2147483648
    %v2711 = vxor.u32 %v2703, 2147483648
    %v2712 = vmul.f32 %v2704, 1.442695
    %v2713 = vpow.pop %v2712
    %v2714 = vmul.f32 %v2705, 1.442695
    %v2715 = vpow.pop %v2714
    %v2716 = vmul.f32 %v2706, 1.442695
    %v2717 = vpow.pop %v2716
    %v2718 = vmul.f32 %v2707, 1.442695
    %v2719 = vpow.pop %v2718
    %v2720 = vmul.f32 %v2708, 1.442695
    %v2721 = vpow.pop %v2720
    %v2722 = vmul.f32 %v2709, 1.442695
    %v2723 = vpow.pop %v2722
    %v2724 = vmul.f32 %v2710, 1.442695
    %v2725 = vpow.pop %v2724
    %v2726 = vmul.f32 %v2711, 1.442695
    %v2727 = vpow.pop %v2726
    %v2728 = vadd.f32 %v2713, 1.0
    %v2729 = vadd.f32 %v2715, 1.0
    %v2730 = vadd.f32 %v2717, 1.0
    %v2731 = vadd.f32 %v2719, 1.0
    %v2732 = vadd.f32 %v2721, 1.0
    %v2733 = vadd.f32 %v2723, 1.0
    %v2734 = vadd.f32 %v2725, 1.0
    %v2735 = vadd.f32 %v2727, 1.0
    %v2736 = vrcp.pop %v2728
    %v2737 = vmul.f32 1.0, %v2736
    %v2738 = vrcp.pop %v2729
    %v2739 = vmul.f32 1.0, %v2738
    %v2740 = vrcp.pop %v2730
    %v2741 = vmul.f32 1.0, %v2740
    %v2742 = vrcp.pop %v2731
    %v2743 = vmul.f32 1.0, %v2742
    %v2744 = vrcp.pop %v2732
    %v2745 = vmul.f32 1.0, %v2744
    %v2746 = vrcp.pop %v2733
    %v2747 = vmul.f32 1.0, %v2746
    %v2748 = vrcp.pop %v2734
    %v2749 = vmul.f32 1.0, %v2748
    %v2750 = vrcp.pop %v2735
    %v2751 = vmul.f32 1.0, %v2750
    %v2752 = vtanh.pop %v2696
    %v2753 = vtanh.pop %v2697
    %v2754 = vtanh.pop %v2698
    %v2755 = vtanh.pop %v2699
    %v2756 = vtanh.pop %v2700
    %v2757 = vtanh.pop %v2701
    %v2758 = vtanh.pop %v2702
    %v2759 = vtanh.pop %v2703
    %v2768 = vrot.slane %v2528, 7
    %v2769 = vrot.slane %v2529, 7
    %v2770 = vrot.slane %v2530, 7
    %v2771 = vrot.slane %v2531, 7
    %v2772 = vrot.slane %v2532, 7
    %v2773 = vrot.slane %v2533, 7
    %v2774 = vrot.slane %v2534, 7
    %v2775 = vrot.slane %v2535, 7
    %v2784 = vmul.f32 %v2737, %v2768
    %v2785 = vmul.f32 %v2739, %v2769
    %v2786 = vmul.f32 %v2741, %v2770
    %v2787 = vmul.f32 %v2743, %v2771
    %v2788 = vmul.f32 %v2745, %v2772
    %v2789 = vmul.f32 %v2747, %v2773
    %v2790 = vmul.f32 %v2749, %v2774
    %v2791 = vmul.f32 %v2751, %v2775
    %2800 = vrot.lane.b32.xlu0 %v2752, 32
    %v2801 = vpop.permute.xlu0 %2800
    %2802 = vrot.lane.b32.xlu0 %v2753, 32
    %v2803 = vpop.permute.xlu0 %2802
    %2804 = vrot.lane.b32.xlu0 %v2754, 32
    %v2805 = vpop.permute.xlu0 %2804
    %2806 = vrot.lane.b32.xlu0 %v2755, 32
    %v2807 = vpop.permute.xlu0 %2806
    %2808 = vrot.lane.b32.xlu0 %v2756, 32
    %v2809 = vpop.permute.xlu0 %2808
    %2810 = vrot.lane.b32.xlu0 %v2757, 32
    %v2811 = vpop.permute.xlu0 %2810
    %2812 = vrot.lane.b32.xlu0 %v2758, 32
    %v2813 = vpop.permute.xlu0 %2812
    %2814 = vrot.lane.b32.xlu0 %v2759, 32
    %v2815 = vpop.permute.xlu0 %2814
    %v2824 = vmul.f32 %v2737, %v2801
    %v2825 = vmul.f32 %v2739, %v2803
    %v2826 = vmul.f32 %v2741, %v2805
    %v2827 = vmul.f32 %v2743, %v2807
    %v2828 = vmul.f32 %v2745, %v2809
    %v2829 = vmul.f32 %v2747, %v2811
    %v2830 = vmul.f32 %v2749, %v2813
    %v2831 = vmul.f32 %v2751, %v2815
    %2840 = vrot.lane.b32.xlu0 %v2824, 32
    %v2841 = vpop.permute.xlu0 %2840
    %2842 = vrot.lane.b32.xlu0 %v2825, 32
    %v2843 = vpop.permute.xlu0 %2842
    %2844 = vrot.lane.b32.xlu0 %v2826, 32
    %v2845 = vpop.permute.xlu0 %2844
    %2846 = vrot.lane.b32.xlu0 %v2827, 32
    %v2847 = vpop.permute.xlu0 %2846
    %2848 = vrot.lane.b32.xlu0 %v2828, 32
    %v2849 = vpop.permute.xlu0 %2848
    %2850 = vrot.lane.b32.xlu0 %v2829, 32
    %v2851 = vpop.permute.xlu0 %2850
    %2852 = vrot.lane.b32.xlu0 %v2830, 32
    %v2853 = vpop.permute.xlu0 %2852
    %2854 = vrot.lane.b32.xlu0 %v2831, 32
    %v2855 = vpop.permute.xlu0 %2854
    %v2864 = vadd.f32 %v2784, %v2841
    %v2865 = vadd.f32 %v2785, %v2843
    %v2866 = vadd.f32 %v2786, %v2845
    %v2867 = vadd.f32 %v2787, %v2847
    %v2868 = vadd.f32 %v2788, %v2849
    %v2869 = vadd.f32 %v2789, %v2851
    %v2870 = vadd.f32 %v2790, %v2853
    %v2871 = vadd.f32 %v2791, %v2855
    %v2872 = vtanh.pop %v2864
    %v2873 = vtanh.pop %v2865
    %v2874 = vtanh.pop %v2866
    %v2875 = vtanh.pop %v2867
    %v2876 = vtanh.pop %v2868
    %v2877 = vtanh.pop %v2869
    %v2878 = vtanh.pop %v2870
    %v2879 = vtanh.pop %v2871
    %2888 = vrot.lane.b32.xlu0 %v2872, 32
    %v2889 = vpop.permute.xlu0 %2888
    %2890 = vrot.lane.b32.xlu0 %v2873, 32
    %v2891 = vpop.permute.xlu0 %2890
    %2892 = vrot.lane.b32.xlu0 %v2874, 32
    %v2893 = vpop.permute.xlu0 %2892
    %2894 = vrot.lane.b32.xlu0 %v2875, 32
    %v2895 = vpop.permute.xlu0 %2894
    %2896 = vrot.lane.b32.xlu0 %v2876, 32
    %v2897 = vpop.permute.xlu0 %2896
    %2898 = vrot.lane.b32.xlu0 %v2877, 32
    %v2899 = vpop.permute.xlu0 %2898
    %2900 = vrot.lane.b32.xlu0 %v2878, 32
    %v2901 = vpop.permute.xlu0 %2900
    %2902 = vrot.lane.b32.xlu0 %v2879, 32
    %v2903 = vpop.permute.xlu0 %2902
    %v2912 = vmul.f32 %v2737, %v2889
    %v2913 = vmul.f32 %v2739, %v2891
    %v2914 = vmul.f32 %v2741, %v2893
    %v2915 = vmul.f32 %v2743, %v2895
    %v2916 = vmul.f32 %v2745, %v2897
    %v2917 = vmul.f32 %v2747, %v2899
    %v2918 = vmul.f32 %v2749, %v2901
    %v2919 = vmul.f32 %v2751, %v2903
    %v2928 = vrot.slane %v2913, 7
    %v2929 = vrot.slane %v2914, 6
    %v2930 = vsel %vm570, %v2929, %v2928
    %v2931 = vrot.slane %v2915, 5
    %v2932 = vsel %vm573, %v2931, %v2930
    %v2933 = vrot.slane %v2916, 4
    %v2934 = vsel %vm576, %v2933, %v2932
    %v2935 = vrot.slane %v2917, 3
    %v2936 = vsel %vm579, %v2935, %v2934
    %v2937 = vrot.slane %v2918, 2
    %v2938 = vsel %vm582, %v2937, %v2936
    %v2939 = vrot.slane %v2919, 1
    %v2940 = vsel %vm585, %v2939, %v2938
    %2941 = vrot.lane.b32.xlu0 %v2912, 64
    %v2942 = vpop.permute.xlu0 %2941
    %2943 = vrot.lane.b32.xlu0 %v2940, 64
    %v2944 = vpop.permute.xlu0 %2943
    %vm2947 = vcmask 261127
    %2948 = vst.msk [vmem:[#allocation2 - $0x7] sm:$0x80] %vm2947, %v2942
    %vm2949 = vcmask 260096
    %2950 = vst.msk [vmem:[#allocation2 + $0x1] sm:$0x7f] %vm2949, %v2944
    %v2959 = vrot.slane %v2865, 7
    %v2960 = vrot.slane %v2866, 6
    %v2961 = vsel %vm570, %v2960, %v2959
    %v2962 = vrot.slane %v2867, 5
    %v2963 = vsel %vm573, %v2962, %v2961
    %v2964 = vrot.slane %v2868, 4
    %v2965 = vsel %vm576, %v2964, %v2963
    %v2966 = vrot.slane %v2869, 3
    %v2967 = vsel %vm579, %v2966, %v2965
    %v2968 = vrot.slane %v2870, 2
    %v2969 = vsel %vm582, %v2968, %v2967
    %v2970 = vrot.slane %v2871, 1
    %v2971 = vsel %vm585, %v2970, %v2969
    %2972 = vrot.lane.b32.xlu0 %v2864, 96
    %v2973 = vpop.permute.xlu0 %2972
    %2974 = vrot.lane.b32.xlu0 %v2971, 96
    %v2975 = vpop.permute.xlu0 %2974
    %2978 = vst.msk [vmem:[#allocation3 - $0x7] sm:$0x80] %vm2947, %v2973
    %2979 = vst.msk [vmem:[#allocation3 + $0x1] sm:$0x7f] %vm2949, %v2975
    // Predicated region
    $region46: #{tpu_custom_call.1} parent=1 // pred_check
      %p2980 = pneg %p79
    $region47: #{tpu_custom_call.1} parent=1 // pred_check_branch
      %2982 = sbr.rel (%p2980) target = $region49
    $region48: #{tpu_custom_call.1} parent=1 // pred_region
      %v2983 = vld [vmem:[#allocation10] sm:$0xff]
      %v2984 = vld [vmem:[#allocation10 + $0x8] sm:$0xff]
      %v2985 = vld [vmem:[#allocation10 + $0x10] sm:$0xff]
      %v2986 = vld [vmem:[#allocation10 + $0x18] sm:$0xff]
      %v2987 = vld [vmem:[%s5] sm:$0x1]
      %v2989 = vlaneseq
      %v2990 = vshrl.u32 %v2989, 7
      %v2991 = vsub.s32 0, %v2990
      %v2992 = vrot.slane %v2987, %v2991
      %v2994 = vrot.slane %v2912, 7
      %v2995 = vrot.slane %v2913, 6
      %v2996 = vsel %vm570, %v2995, %v2994
      %v2997 = vrot.slane %v2914, 5
      %v2998 = vsel %vm573, %v2997, %v2996
      %v2999 = vrot.slane %v2915, 4
      %v3000 = vsel %vm576, %v2999, %v2998
      %v3001 = vrot.slane %v2916, 3
      %v3002 = vsel %vm579, %v3001, %v3000
      %v3003 = vrot.slane %v2917, 2
      %v3004 = vsel %vm582, %v3003, %v3002
      %v3005 = vrot.slane %v2918, 1
      %v3006 = vsel %vm585, %v3005, %v3004
      %v3007 = vsel %vm588, %v2919, %v3006
      %3008 = vrot.lane.b32.xlu0 %v3007, 64
      %v3009 = vpop.permute.xlu0 %3008
      %v3010 = vsel %vm239, %v3009, 0
      %3012 = vmatprep.subr.mxu0 0.0
      %3013 = vmatpush1.msra.mxu0 %v2983
      %3014 = vmatprep.subr.mxu0 0.0
      %3015 = vmatpush1.msra.mxu0 %v2984
      %3016 = vmatprep.subr.mxu0 0.0
      %3017 = vmatpush1.msra.mxu0 %v2985
      %3018 = vmatprep.subr.mxu0 0.0
      %3019 = vmatpush1.msra.mxu0 %v2986
      %3020 = vmatprep.subr.mxu0 0.0
      %3021 = vmatpush1.msra.mxu0 0.0
      %3022 = vmatprep.subr.mxu0 0.0
      %3023 = vmatpush1.msra.mxu0 0.0
      %3024 = vmatprep.subr.mxu0 0.0
      %3025 = vmatpush1.msra.mxu0 0.0
      %3026 = vmatprep.subr.mxu0 0.0
      %3027 = vmatpush1.msra.mxu0 0.0
      %3028 = vmatprep.subr.mxu0 0.0
      %3029 = vmatpush1.msra.mxu0 0.0
      %3030 = vmatprep.subr.mxu0 0.0
      %3031 = vmatpush1.msra.mxu0 0.0
      %3032 = vmatprep.subr.mxu0 0.0
      %3033 = vmatpush1.msra.mxu0 0.0
      %3034 = vmatprep.subr.mxu0 0.0
      %3035 = vmatpush1.msra.mxu0 0.0
      %3036 = vmatprep.subr.mxu0 0.0
      %3037 = vmatpush1.msra.mxu0 0.0
      %3038 = vmatprep.subr.mxu0 0.0
      %3039 = vmatpush1.msra.mxu0 0.0
      %3040 = vmatprep.subr.mxu0 0.0
      %3041 = vmatpush1.msra.mxu0 0.0
      %3042 = vmatprep.subr.mxu0 0.0
      %3043 = vmatpush1.msra.mxu0 0.0
      %3044 = vmatprep.subr.mxu0 0.0
      %3045 = vmatpush1.msra.mxu0 0.0
      %3046 = vmatprep.subr.mxu0 0.0
      %3047 = vmatpush1.msra.mxu0 0.0
      %3048 = vmatprep.subr.mxu0 0.0
      %3049 = vmatpush1.msra.mxu0 0.0
      %3050 = vmatprep.subr.mxu0 0.0
      %3051 = vmatpush1.msra.mxu0 0.0
      %3052 = vmatprep.subr.mxu0 0.0
      %3053 = vmatpush1.msra.mxu0 0.0
      %3054 = vmatprep.subr.mxu0 0.0
      %3055 = vmatpush1.msra.mxu0 0.0
      %3056 = vmatprep.subr.mxu0 0.0
      %3057 = vmatpush1.msra.mxu0 0.0
      %3058 = vmatprep.subr.mxu0 0.0
      %3059 = vmatpush1.msra.mxu0 0.0
      %3060 = vmatprep.subr.mxu0 0.0
      %3061 = vmatpush1.msra.mxu0 0.0
      %3062 = vmatprep.subr.mxu0 0.0
      %3063 = vmatpush1.msra.mxu0 0.0
      %3064 = vmatprep.subr.mxu0 0.0
      %3065 = vmatpush1.msra.mxu0 0.0
      %3066 = vmatprep.subr.mxu0 0.0
      %3067 = vmatpush1.msra.mxu0 0.0
      %3068 = vmatprep.subr.mxu0 0.0
      %3069 = vmatpush1.msra.mxu0 0.0
      %3070 = vmatprep.subr.mxu0 0.0
      %3071 = vmatpush1.msra.mxu0 0.0
      %3072 = vmatprep.subr.mxu0 0.0
      %3073 = vmatpush1.msra.mxu0 0.0
      %3074 = vmatprep.subr.mxu0 0.0
      %3075 = vmatpush1.msra.mxu0 0.0
      %3076 = vmatprep.mubr.f32.mxu0 0.0
      %3077 = vmatmul.mubr.f32.gmra.mrb[0].mxu0 %v3010
      %v3078 = vpop.f32.mrb[0].mxu0
      %v3079 = vadd.f32 %v2992, %v3078
      %v3080 = vpop.f32.mrb[0].mxu0
      %3081 = vdwg.mxu0
      %3082 = vst [vmem:[#allocation12] sm:$0xff] %v3079
    $region49: #{tpu_custom_call.1} parent=1 // pred_fallthru
      _
    // Predicated region
    $region50: #{tpu_custom_call.1} parent=1 // pred_check
      _
    $region51: #{tpu_custom_call.1} parent=1 // pred_check_branch
      %3084 = sbr.rel (0) target = $region53
    $region52: #{tpu_custom_call.1} parent=1 // pred_region
      %s3086 = ssub.s32 128, 128
      %3087 = vsyncadd [#allocation6], %s3086
      %s3089 = sshll.u32 [#allocation12], 4
      %s3090 = int_to_ptr.vmem [resolvable:$true] %s3089
      %3092 = dma.vmem_to_hbm [thread:$0]  %s3090, 128, %s6, [#allocation6]
    $region53: #{tpu_custom_call.1} parent=1 // pred_fallthru
      _
    // Predicated region
    $region54: #{tpu_custom_call.1} parent=1 // pred_check
      _
    $region55: #{tpu_custom_call.1} parent=1 // pred_check_branch
      %3094 = sbr.rel (0) target = $region57
    $region56: #{tpu_custom_call.1} parent=1 // pred_region
      %3095 = dma.done [#allocation6], 128
    $region57: #{tpu_custom_call.1} parent=1 // pred_fallthru
      _
    %3096 = vsyncpa [#allocation5], 1
    %3097 = vsyncpa [#allocation8], 1
    %3098 = vsyncpa [#allocation11], 1
    %3099 = vsyncpa [#allocation6], 1

</llo_original>
